<compile_context>
chip_gen: v6e
topology: v6e:2x2x1
jax: 0.10.0
libtpu: 0.0.40
codegen_flags: <defaults>
</compile_context>

<pallas_src>
import jax
import jax.numpy as jnp
from jax.experimental import pallas as pl
from jax.experimental.pallas import tpu as pltpu  # noqa: F401  (kept for TPU-backend symmetry)


def _se_conv1x1_kernel(gate_ref, x_ref, w_ref, o_ref):
    # gate_ref: (1, C_in)      -- pre-sigmoid SE logits (x285), f32
    # x_ref:    (C_in, HW)     -- main activation (x281), f32
    # w_ref:    (C_out, C_in)  -- 1x1 conv weight, bf16 (persistent bf16 -> half the HBM bytes)
    # o_ref:    (C_out, HW)    -- f32
    gate = jax.nn.sigmoid(gate_ref[...])                        # (1, C_in), f32 on EUP/VPU
    # Fold the per-input-channel gate into the weight (sublane broadcast, f32):
    #   out[o, hw] = sum_c (w[o,c] * sig(g[c])) * x[c, hw]
    w = w_ref[...].astype(jnp.float32) * gate                   # (C_out, C_in), f32
    o_ref[...] = jnp.dot(
        w, x_ref[...], preferred_element_type=jnp.float32
    ).astype(o_ref.dtype)


def se_gate_conv1x1(x285, x281, weight):
    """x285: (1, C_in, 1, 1), x281: (1, C_in, H, W), weight: (C_out, C_in, 1, 1)
    -> (1, C_out, H, W)  ==  Conv2d(C_in, C_out, 1, bias=False)(sigmoid(x285) * x281).

    `weight` should be handed in already cast to bf16 once at init time (not per call)."""
    N, C_in, H, W = x281.shape
    assert N == 1, "kernel wrapper assumes batch=1 (as in the reference module)"
    C_out = weight.shape[0]
    HW = H * W

    # Channels-major slabs: all reshapes below are free (no data movement) for N=1.
    x_flat = x281.reshape(C_in, HW)          # (C_in, HW)
    gate_flat = x285.reshape(1, C_in)        # (1, C_in)  -- lane-dense gate layout
    w_flat = weight.reshape(C_out, C_in)     # (C_out, C_in) -- no transpose

    bytes_accessed = (
        gate_flat.size * gate_flat.dtype.itemsize
        + x_flat.size * x_flat.dtype.itemsize
        + w_flat.size * w_flat.dtype.itemsize
        + C_out * HW * x281.dtype.itemsize
    )

    out_flat = pl.pallas_call(
        _se_conv1x1_kernel,
        out_shape=jax.ShapeDtypeStruct((C_out, HW), x281.dtype),
        in_specs=[
            pl.BlockSpec((1, C_in), lambda: (0, 0)),
            pl.BlockSpec((C_in, HW), lambda: (0, 0)),
            pl.BlockSpec((C_out, C_in), lambda: (0, 0)),
        ],
        out_specs=pl.BlockSpec((C_out, HW), lambda: (0, 0)),
        cost_estimate=pl.CostEstimate(
            flops=2 * C_out * C_in * HW,
            transcendentals=C_in,
            bytes_accessed=bytes_accessed,
        ),
    )(gate_flat, x_flat, w_flat)

    # (C_out, HW) -> (1, C_out, H, W): plain reshape, no transpose.
    return out_flat.reshape(N, C_out, H, W)


def _reference(x285, x281, weight_f32):
    gate = jax.nn.sigmoid(x285)                                  # (1, C_in, 1, 1)
    scaled = gate * x281                                         # (1, C_in, H, W)
    w = weight_f32.reshape(weight_f32.shape[0], weight_f32.shape[1])
    return jnp.einsum("oc,nchw->nohw", w, scaled)


if __name__ == "__main__":
    key = jax.random.PRNGKey(0)
    k1, k2, k3 = jax.random.split(key, 3)

    # Shapes implied by the module: x281 (1, 816, 7, 7), x285 (1, 816, 1, 1),
    # conv weight (232, 816, 1, 1).
    C_in, C_out, H, W = 816, 232, 7, 7
    x281 = jax.random.normal(k1, (1, C_in, H, W), dtype=jnp.float32)
    x285 = jax.random.normal(k2, (1, C_in, 1, 1), dtype=jnp.float32)
    weight_f32 = jax.random.normal(k3, (C_out, C_in, 1, 1), dtype=jnp.float32) * (1.0 / (C_in ** 0.5))

    # Pre-cast the persistent conv weight to bf16 ONCE at init (the model's storage dtype),
    # so every forward call moves half the weight bytes over HBM.
    weight = weight_f32.astype(jnp.bfloat16)

    out = jax.block_until_ready(se_gate_conv1x1(x285, x281, weight))

    # Reference uses the same stored (bf16-quantized) weight so the check isolates kernel math;
    # remaining tolerance covers MXU dot rounding only.
    ref = jax.block_until_ready(_reference(x285, x281, weight.astype(jnp.float32)))
    assert out.shape == (1, C_out, H, W), out.shape
    assert jnp.allclose(out, ref, atol=2e-2, rtol=2e-2), "mismatch vs reference"

    print("KERNEL_OK")
</pallas_src>

<mosaic_0001>
module attributes {stable_mosaic.version = 11 : i64} {
  func.func @_se_conv1x1_kernel(%arg0: memref<1x816xf32, #tpu.memory_space<vmem>>, %arg1: memref<816x49xf32, #tpu.memory_space<vmem>>, %arg2: memref<232x816xbf16, #tpu.memory_space<vmem>>, %arg3: memref<232x49xf32, #tpu.memory_space<vmem>>) attributes {dimension_semantics = [], scalar_prefetch = 0 : i64, scratch_operands = 0 : i64, tpu.core_type = #tpu.core_type<tc>} {
    %c0 = arith.constant 0 : index
    %c0_0 = arith.constant 0 : index
    %0 = vector.load %arg0[%c0, %c0_0] : memref<1x816xf32, #tpu.memory_space<vmem>>, vector<1x816xf32>
    %1 = arith.negf %0 : vector<1x816xf32>
    %2 = math.exp %1 : vector<1x816xf32>
    %cst = arith.constant 1.000000e+00 : f32
    %3 = vector.broadcast %cst : f32 to vector<1x816xf32>
    %4 = arith.addf %3, %2 : vector<1x816xf32>
    %5 = arith.divf %3, %4 : vector<1x816xf32>
    %c0_1 = arith.constant 0 : index
    %c0_2 = arith.constant 0 : index
    %6 = vector.load %arg2[%c0_1, %c0_2] : memref<232x816xbf16, #tpu.memory_space<vmem>>, vector<232x816xbf16>
    %7 = arith.extf %6 : vector<232x816xbf16> to vector<232x816xf32>
    %8 = vector.broadcast %5 : vector<1x816xf32> to vector<232x816xf32>
    %9 = arith.mulf %7, %8 : vector<232x816xf32>
    %c0_3 = arith.constant 0 : index
    %c0_4 = arith.constant 0 : index
    %10 = vector.load %arg1[%c0_3, %c0_4] : memref<816x49xf32, #tpu.memory_space<vmem>>, vector<816x49xf32>
    %cst_5 = arith.constant dense<0.000000e+00> : vector<232x49xf32>
    %11 = tpu.matmul %9, %10, %cst_5 {dimension_numbers = #tpu.dot_dimension_numbers<[1], [0], [0], [1], [0, 0, 1, 1], [], []>} : vector<232x816xf32>, vector<816x49xf32>, vector<232x49xf32> -> vector<232x49xf32>
    %c0_6 = arith.constant 0 : index
    %c0_7 = arith.constant 0 : index
    %12 = vector.load %arg3[%c0_6, %c0_7] : memref<232x49xf32, #tpu.memory_space<vmem>>, vector<232x49xf32>
    tpu.vector_store %arg3[%c0_6, %c0_7], %11 {strides = array<i32>} : memref<232x49xf32, #tpu.memory_space<vmem>>, vector<232x49xf32>,
    return
  }
}

</mosaic_0001>

<llo_original>
// kernel: tpu_custom_call.1
$region0: #{tpu_custom_call.1}
  #allocation0 [shape = 'u32[]', space=smem, size = 0x4, offset = 0x4, fixed_abs, tag = 'smem constant byte address 0x4 - core index']
  #allocation1 [shape = 'u32[144,128]{1,0:T(1,128)}', space=vmem, size = 0x12000, scoped, tag = 'internal scratch']
  %s0 = inlined_call_operand.vmem [shape: f32[1,816], index: 0, kind: input, shape index: {}]
  %s1 = inlined_call_operand.vmem [shape: f32[816,49], index: 1, kind: input, shape index: {}]
  %s2 = inlined_call_operand.vmem [shape: bf16[232,816], index: 2, kind: input, shape index: {}]
  %s3 = inlined_call_operand.vmem [shape: f32[232,49], index: 3, kind: output, shape index: {}]
  %s4 = sld [smem:[#allocation0]]
  $region22: #{tpu_custom_call.1} parent=0
    _
  %s6 = ssub.s32 1, %s4
  %s7 = scalar_select 0, %s6, %s4
  // Predicated region
  $region2: #{tpu_custom_call.1} parent=0 // pred_check
    _
  $region3: #{tpu_custom_call.1} parent=0 // pred_check_branch
    %9 = sbr.rel (0) target = $region5
  $region4: #{tpu_custom_call.1} parent=0 // pred_region
    _
  $region5: #{tpu_custom_call.1} parent=0 // pred_fallthru
    _
  // Predicated region
  $region6: #{tpu_custom_call.1} parent=0 // pred_check
    _
  $region7: #{tpu_custom_call.1} parent=0 // pred_check_branch
    %11 = sbr.rel (0) target = $region9
  $region8: #{tpu_custom_call.1} parent=0 // pred_region
    _
  $region9: #{tpu_custom_call.1} parent=0 // pred_fallthru
    _
  // Predicated region
  $region10: #{tpu_custom_call.1} parent=0 // pred_check
    _
  $region11: #{tpu_custom_call.1} parent=0 // pred_check_branch
    %13 = sbr.rel (0) target = $region13
  $region12: #{tpu_custom_call.1} parent=0 // pred_region
    _
  $region13: #{tpu_custom_call.1} parent=0 // pred_fallthru
    _
  %v14 = vld [vmem:[%s0] sm:$0x7f]
  %v15 = vxor.u32 %v14, 2147483648
  %v16 = vmul.f32 %v15, 1.442695
  %v17 = vpow.pop %v16
  %v18 = vadd.f32 %v17, 1.0
  %v19 = vrcp.pop %v18
  %v20 = vmul.f32 1.0, %v19
  %v21 = vld [vmem:[%s2] sm:$0xff]
  %v22 = vld [vmem:[%s2 + $0x8] sm:$0xff]
  %v23 = vld [vmem:[%s2 + $0x10] sm:$0xff]
  %v24 = vld [vmem:[%s2 + $0x18] sm:$0xf]
  %v25 = vld [vmem:[%s2 + $0x1c] sm:$0xff]
  %v26 = vld [vmem:[%s2 + $0x24] sm:$0xff]
  %v27 = vld [vmem:[%s2 + $0x2c] sm:$0xff]
  %v28 = vld [vmem:[%s2 + $0x34] sm:$0xf]
  %v29 = vld [vmem:[%s2 + $0x38] sm:$0xff]
  %v30 = vld [vmem:[%s2 + $0x40] sm:$0xff]
  %v31 = vld [vmem:[%s2 + $0x48] sm:$0xff]
  %v32 = vld [vmem:[%s2 + $0x50] sm:$0xf]
  %v33 = vld [vmem:[%s2 + $0x54] sm:$0xff]
  %v34 = vld [vmem:[%s2 + $0x5c] sm:$0xff]
  %v35 = vld [vmem:[%s2 + $0x64] sm:$0xff]
  %v36 = vld [vmem:[%s2 + $0x6c] sm:$0xf]
  %v37 = vld [vmem:[%s2 + $0x70] sm:$0xff]
  %v38 = vld [vmem:[%s2 + $0x78] sm:$0xff]
  %v39 = vld [vmem:[%s2 + $0x80] sm:$0xff]
  %v40 = vld [vmem:[%s2 + $0x88] sm:$0xf]
  %v41 = vld [vmem:[%s2 + $0x8c] sm:$0xff]
  %v42 = vld [vmem:[%s2 + $0x94] sm:$0xff]
  %v43 = vld [vmem:[%s2 + $0x9c] sm:$0xff]
  %v44 = vld [vmem:[%s2 + $0xa4] sm:$0xf]
  %v45 = vld [vmem:[%s2 + $0xa8] sm:$0xff]
  %v46 = vld [vmem:[%s2 + $0xb0] sm:$0xff]
  %v47 = vld [vmem:[%s2 + $0xb8] sm:$0xff]
  %v48 = vld [vmem:[%s2 + $0xc0] sm:$0xf]
  %v49 = vld [vmem:[%s2 + $0xc4] sm:$0xff]
  %v50 = vld [vmem:[%s2 + $0xcc] sm:$0xff]
  %v51 = vld [vmem:[%s2 + $0xd4] sm:$0xff]
  %v52 = vld [vmem:[%s2 + $0xdc] sm:$0xf]
  %v53 = vld [vmem:[%s2 + $0xe0] sm:$0xff]
  %v54 = vld [vmem:[%s2 + $0xe8] sm:$0xff]
  %v55 = vld [vmem:[%s2 + $0xf0] sm:$0xff]
  %v56 = vld [vmem:[%s2 + $0xf8] sm:$0xf]
  %v57 = vld [vmem:[%s2 + $0xfc] sm:$0xff]
  %v58 = vld [vmem:[%s2 + $0x104] sm:$0xff]
  %v59 = vld [vmem:[%s2 + $0x10c] sm:$0xff]
  %v60 = vld [vmem:[%s2 + $0x114] sm:$0xf]
  %v61 = vld [vmem:[%s2 + $0x118] sm:$0xff]
  %v62 = vld [vmem:[%s2 + $0x120] sm:$0xff]
  %v63 = vld [vmem:[%s2 + $0x128] sm:$0xff]
  %v64 = vld [vmem:[%s2 + $0x130] sm:$0xf]
  %v65 = vld [vmem:[%s2 + $0x134] sm:$0xff]
  %v66 = vld [vmem:[%s2 + $0x13c] sm:$0xff]
  %v67 = vld [vmem:[%s2 + $0x144] sm:$0xff]
  %v68 = vld [vmem:[%s2 + $0x14c] sm:$0xf]
  %v69 = vld [vmem:[%s2 + $0x150] sm:$0xff]
  %v70 = vld [vmem:[%s2 + $0x158] sm:$0xff]
  %v71 = vld [vmem:[%s2 + $0x160] sm:$0xff]
  %v72 = vld [vmem:[%s2 + $0x168] sm:$0xf]
  %v73 = vld [vmem:[%s2 + $0x16c] sm:$0xff]
  %v74 = vld [vmem:[%s2 + $0x174] sm:$0xff]
  %v75 = vld [vmem:[%s2 + $0x17c] sm:$0xff]
  %v76 = vld [vmem:[%s2 + $0x184] sm:$0xf]
  %v77 = vld [vmem:[%s2 + $0x188] sm:$0xff]
  %v78 = vld [vmem:[%s2 + $0x190] sm:$0xff]
  %v79 = vld [vmem:[%s2 + $0x198] sm:$0xff]
  %v80 = vld [vmem:[%s2 + $0x1a0] sm:$0xf]
  %v81 = vld [vmem:[%s2 + $0x1a4] sm:$0xff]
  %v82 = vld [vmem:[%s2 + $0x1ac] sm:$0xff]
  %v83 = vld [vmem:[%s2 + $0x1b4] sm:$0xff]
  %v84 = vld [vmem:[%s2 + $0x1bc] sm:$0xf]
  %v85 = vld [vmem:[%s2 + $0x1c0] sm:$0xff]
  %v86 = vld [vmem:[%s2 + $0x1c8] sm:$0xff]
  %v87 = vld [vmem:[%s2 + $0x1d0] sm:$0xff]
  %v88 = vld [vmem:[%s2 + $0x1d8] sm:$0xf]
  %v89 = vld [vmem:[%s2 + $0x1dc] sm:$0xff]
  %v90 = vld [vmem:[%s2 + $0x1e4] sm:$0xff]
  %v91 = vld [vmem:[%s2 + $0x1ec] sm:$0xff]
  %v92 = vld [vmem:[%s2 + $0x1f4] sm:$0xf]
  %v93 = vld [vmem:[%s2 + $0x1f8] sm:$0xff]
  %v94 = vld [vmem:[%s2 + $0x200] sm:$0xff]
  %v95 = vld [vmem:[%s2 + $0x208] sm:$0xff]
  %v96 = vld [vmem:[%s2 + $0x210] sm:$0xf]
  %v97 = vld [vmem:[%s2 + $0x214] sm:$0xff]
  %v98 = vld [vmem:[%s2 + $0x21c] sm:$0xff]
  %v99 = vld [vmem:[%s2 + $0x224] sm:$0xff]
  %v100 = vld [vmem:[%s2 + $0x22c] sm:$0xf]
  %v101 = vld [vmem:[%s2 + $0x230] sm:$0xff]
  %v102 = vld [vmem:[%s2 + $0x238] sm:$0xff]
  %v103 = vld [vmem:[%s2 + $0x240] sm:$0xff]
  %v104 = vld [vmem:[%s2 + $0x248] sm:$0xf]
  %v105 = vld [vmem:[%s2 + $0x24c] sm:$0xff]
  %v106 = vld [vmem:[%s2 + $0x254] sm:$0xff]
  %v107 = vld [vmem:[%s2 + $0x25c] sm:$0xff]
  %v108 = vld [vmem:[%s2 + $0x264] sm:$0xf]
  %v109 = vld [vmem:[%s2 + $0x268] sm:$0xff]
  %v110 = vld [vmem:[%s2 + $0x270] sm:$0xff]
  %v111 = vld [vmem:[%s2 + $0x278] sm:$0xff]
  %v112 = vld [vmem:[%s2 + $0x280] sm:$0xf]
  %v113 = vld [vmem:[%s2 + $0x284] sm:$0xff]
  %v114 = vld [vmem:[%s2 + $0x28c] sm:$0xff]
  %v115 = vld [vmem:[%s2 + $0x294] sm:$0xff]
  %v116 = vld [vmem:[%s2 + $0x29c] sm:$0xf]
  %v117 = vld [vmem:[%s2 + $0x2a0] sm:$0xff]
  %v118 = vld [vmem:[%s2 + $0x2a8] sm:$0xff]
  %v119 = vld [vmem:[%s2 + $0x2b0] sm:$0xff]
  %v120 = vld [vmem:[%s2 + $0x2b8] sm:$0xf]
  %v121 = vld [vmem:[%s2 + $0x2bc] sm:$0xff]
  %v122 = vld [vmem:[%s2 + $0x2c4] sm:$0xff]
  %v123 = vld [vmem:[%s2 + $0x2cc] sm:$0xff]
  %v124 = vld [vmem:[%s2 + $0x2d4] sm:$0xf]
  %v125 = vld [vmem:[%s2 + $0x2d8] sm:$0xff]
  %v126 = vld [vmem:[%s2 + $0x2e0] sm:$0xff]
  %v127 = vld [vmem:[%s2 + $0x2e8] sm:$0xff]
  %v128 = vld [vmem:[%s2 + $0x2f0] sm:$0xf]
  %v129 = vld [vmem:[%s2 + $0x2f4] sm:$0xff]
  %v130 = vld [vmem:[%s2 + $0x2fc] sm:$0xff]
  %v131 = vld [vmem:[%s2 + $0x304] sm:$0xff]
  %v132 = vld [vmem:[%s2 + $0x30c] sm:$0xf]
  %v133 = vld [vmem:[%s2 + $0x310] sm:$0xff]
  %v134 = vld [vmem:[%s2 + $0x318] sm:$0xff]
  %v135 = vld [vmem:[%s2 + $0x320] sm:$0xff]
  %v136 = vld [vmem:[%s2 + $0x328] sm:$0xf]
  %v137 = vunpack.c.l.bf16 %v21
  %v138 = vunpack.c.h.bf16 %v21
  %v139 = vunpack.c.l.bf16 %v22
  %v140 = vunpack.c.h.bf16 %v22
  %v141 = vunpack.c.l.bf16 %v23
  %v142 = vunpack.c.h.bf16 %v23
  %v143 = vunpack.c.l.bf16 %v24
  %v144 = vunpack.c.l.bf16 %v25
  %v145 = vunpack.c.h.bf16 %v25
  %v146 = vunpack.c.l.bf16 %v26
  %v147 = vunpack.c.h.bf16 %v26
  %v148 = vunpack.c.l.bf16 %v27
  %v149 = vunpack.c.h.bf16 %v27
  %v150 = vunpack.c.l.bf16 %v28
  %v151 = vunpack.c.l.bf16 %v29
  %v152 = vunpack.c.h.bf16 %v29
  %v153 = vunpack.c.l.bf16 %v30
  %v154 = vunpack.c.h.bf16 %v30
  %v155 = vunpack.c.l.bf16 %v31
  %v156 = vunpack.c.h.bf16 %v31
  %v157 = vunpack.c.l.bf16 %v32
  %v158 = vunpack.c.l.bf16 %v33
  %v159 = vunpack.c.h.bf16 %v33
  %v160 = vunpack.c.l.bf16 %v34
  %v161 = vunpack.c.h.bf16 %v34
  %v162 = vunpack.c.l.bf16 %v35
  %v163 = vunpack.c.h.bf16 %v35
  %v164 = vunpack.c.l.bf16 %v36
  %v165 = vunpack.c.l.bf16 %v37
  %v166 = vunpack.c.h.bf16 %v37
  %v167 = vunpack.c.l.bf16 %v38
  %v168 = vunpack.c.h.bf16 %v38
  %v169 = vunpack.c.l.bf16 %v39
  %v170 = vunpack.c.h.bf16 %v39
  %v171 = vunpack.c.l.bf16 %v40
  %v172 = vunpack.c.l.bf16 %v41
  %v173 = vunpack.c.h.bf16 %v41
  %v174 = vunpack.c.l.bf16 %v42
  %v175 = vunpack.c.h.bf16 %v42
  %v176 = vunpack.c.l.bf16 %v43
  %v177 = vunpack.c.h.bf16 %v43
  %v178 = vunpack.c.l.bf16 %v44
  %v179 = vunpack.c.l.bf16 %v45
  %v180 = vunpack.c.h.bf16 %v45
  %v181 = vunpack.c.l.bf16 %v46
  %v182 = vunpack.c.h.bf16 %v46
  %v183 = vunpack.c.l.bf16 %v47
  %v184 = vunpack.c.h.bf16 %v47
  %v185 = vunpack.c.l.bf16 %v48
  %v186 = vunpack.c.l.bf16 %v49
  %v187 = vunpack.c.h.bf16 %v49
  %v188 = vunpack.c.l.bf16 %v50
  %v189 = vunpack.c.h.bf16 %v50
  %v190 = vunpack.c.l.bf16 %v51
  %v191 = vunpack.c.h.bf16 %v51
  %v192 = vunpack.c.l.bf16 %v52
  %v193 = vunpack.c.l.bf16 %v53
  %v194 = vunpack.c.h.bf16 %v53
  %v195 = vunpack.c.l.bf16 %v54
  %v196 = vunpack.c.h.bf16 %v54
  %v197 = vunpack.c.l.bf16 %v55
  %v198 = vunpack.c.h.bf16 %v55
  %v199 = vunpack.c.l.bf16 %v56
  %v200 = vunpack.c.l.bf16 %v57
  %v201 = vunpack.c.h.bf16 %v57
  %v202 = vunpack.c.l.bf16 %v58
  %v203 = vunpack.c.h.bf16 %v58
  %v204 = vunpack.c.l.bf16 %v59
  %v205 = vunpack.c.h.bf16 %v59
  %v206 = vunpack.c.l.bf16 %v60
  %v207 = vunpack.c.l.bf16 %v61
  %v208 = vunpack.c.h.bf16 %v61
  %v209 = vunpack.c.l.bf16 %v62
  %v210 = vunpack.c.h.bf16 %v62
  %v211 = vunpack.c.l.bf16 %v63
  %v212 = vunpack.c.h.bf16 %v63
  %v213 = vunpack.c.l.bf16 %v64
  %v214 = vunpack.c.l.bf16 %v65
  %v215 = vunpack.c.h.bf16 %v65
  %v216 = vunpack.c.l.bf16 %v66
  %v217 = vunpack.c.h.bf16 %v66
  %v218 = vunpack.c.l.bf16 %v67
  %v219 = vunpack.c.h.bf16 %v67
  %v220 = vunpack.c.l.bf16 %v68
  %v221 = vunpack.c.l.bf16 %v69
  %v222 = vunpack.c.h.bf16 %v69
  %v223 = vunpack.c.l.bf16 %v70
  %v224 = vunpack.c.h.bf16 %v70
  %v225 = vunpack.c.l.bf16 %v71
  %v226 = vunpack.c.h.bf16 %v71
  %v227 = vunpack.c.l.bf16 %v72
  %v228 = vunpack.c.l.bf16 %v73
  %v229 = vunpack.c.h.bf16 %v73
  %v230 = vunpack.c.l.bf16 %v74
  %v231 = vunpack.c.h.bf16 %v74
  %v232 = vunpack.c.l.bf16 %v75
  %v233 = vunpack.c.h.bf16 %v75
  %v234 = vunpack.c.l.bf16 %v76
  %v235 = vunpack.c.l.bf16 %v77
  %v236 = vunpack.c.h.bf16 %v77
  %v237 = vunpack.c.l.bf16 %v78
  %v238 = vunpack.c.h.bf16 %v78
  %v239 = vunpack.c.l.bf16 %v79
  %v240 = vunpack.c.h.bf16 %v79
  %v241 = vunpack.c.l.bf16 %v80
  %v242 = vunpack.c.l.bf16 %v81
  %v243 = vunpack.c.h.bf16 %v81
  %v244 = vunpack.c.l.bf16 %v82
  %v245 = vunpack.c.h.bf16 %v82
  %v246 = vunpack.c.l.bf16 %v83
  %v247 = vunpack.c.h.bf16 %v83
  %v248 = vunpack.c.l.bf16 %v84
  %v249 = vunpack.c.l.bf16 %v85
  %v250 = vunpack.c.h.bf16 %v85
  %v251 = vunpack.c.l.bf16 %v86
  %v252 = vunpack.c.h.bf16 %v86
  %v253 = vunpack.c.l.bf16 %v87
  %v254 = vunpack.c.h.bf16 %v87
  %v255 = vunpack.c.l.bf16 %v88
  %v256 = vunpack.c.l.bf16 %v89
  %v257 = vunpack.c.h.bf16 %v89
  %v258 = vunpack.c.l.bf16 %v90
  %v259 = vunpack.c.h.bf16 %v90
  %v260 = vunpack.c.l.bf16 %v91
  %v261 = vunpack.c.h.bf16 %v91
  %v262 = vunpack.c.l.bf16 %v92
  %v263 = vunpack.c.l.bf16 %v93
  %v264 = vunpack.c.h.bf16 %v93
  %v265 = vunpack.c.l.bf16 %v94
  %v266 = vunpack.c.h.bf16 %v94
  %v267 = vunpack.c.l.bf16 %v95
  %v268 = vunpack.c.h.bf16 %v95
  %v269 = vunpack.c.l.bf16 %v96
  %v270 = vunpack.c.l.bf16 %v97
  %v271 = vunpack.c.h.bf16 %v97
  %v272 = vunpack.c.l.bf16 %v98
  %v273 = vunpack.c.h.bf16 %v98
  %v274 = vunpack.c.l.bf16 %v99
  %v275 = vunpack.c.h.bf16 %v99
  %v276 = vunpack.c.l.bf16 %v100
  %v277 = vunpack.c.l.bf16 %v101
  %v278 = vunpack.c.h.bf16 %v101
  %v279 = vunpack.c.l.bf16 %v102
  %v280 = vunpack.c.h.bf16 %v102
  %v281 = vunpack.c.l.bf16 %v103
  %v282 = vunpack.c.h.bf16 %v103
  %v283 = vunpack.c.l.bf16 %v104
  %v284 = vunpack.c.l.bf16 %v105
  %v285 = vunpack.c.h.bf16 %v105
  %v286 = vunpack.c.l.bf16 %v106
  %v287 = vunpack.c.h.bf16 %v106
  %v288 = vunpack.c.l.bf16 %v107
  %v289 = vunpack.c.h.bf16 %v107
  %v290 = vunpack.c.l.bf16 %v108
  %v291 = vunpack.c.l.bf16 %v109
  %v292 = vunpack.c.h.bf16 %v109
  %v293 = vunpack.c.l.bf16 %v110
  %v294 = vunpack.c.h.bf16 %v110
  %v295 = vunpack.c.l.bf16 %v111
  %v296 = vunpack.c.h.bf16 %v111
  %v297 = vunpack.c.l.bf16 %v112
  %v298 = vunpack.c.l.bf16 %v113
  %v299 = vunpack.c.h.bf16 %v113
  %v300 = vunpack.c.l.bf16 %v114
  %v301 = vunpack.c.h.bf16 %v114
  %v302 = vunpack.c.l.bf16 %v115
  %v303 = vunpack.c.h.bf16 %v115
  %v304 = vunpack.c.l.bf16 %v116
  %v305 = vunpack.c.l.bf16 %v117
  %v306 = vunpack.c.h.bf16 %v117
  %v307 = vunpack.c.l.bf16 %v118
  %v308 = vunpack.c.h.bf16 %v118
  %v309 = vunpack.c.l.bf16 %v119
  %v310 = vunpack.c.h.bf16 %v119
  %v311 = vunpack.c.l.bf16 %v120
  %v312 = vunpack.c.l.bf16 %v121
  %v313 = vunpack.c.h.bf16 %v121
  %v314 = vunpack.c.l.bf16 %v122
  %v315 = vunpack.c.h.bf16 %v122
  %v316 = vunpack.c.l.bf16 %v123
  %v317 = vunpack.c.h.bf16 %v123
  %v318 = vunpack.c.l.bf16 %v124
  %v319 = vunpack.c.l.bf16 %v125
  %v320 = vunpack.c.h.bf16 %v125
  %v321 = vunpack.c.l.bf16 %v126
  %v322 = vunpack.c.h.bf16 %v126
  %v323 = vunpack.c.l.bf16 %v127
  %v324 = vunpack.c.h.bf16 %v127
  %v325 = vunpack.c.l.bf16 %v128
  %v326 = vunpack.c.l.bf16 %v129
  %v327 = vunpack.c.h.bf16 %v129
  %v328 = vunpack.c.l.bf16 %v130
  %v329 = vunpack.c.h.bf16 %v130
  %v330 = vunpack.c.l.bf16 %v131
  %v331 = vunpack.c.h.bf16 %v131
  %v332 = vunpack.c.l.bf16 %v132
  %v333 = vunpack.c.l.bf16 %v133
  %v334 = vunpack.c.h.bf16 %v133
  %v335 = vunpack.c.l.bf16 %v134
  %v336 = vunpack.c.h.bf16 %v134
  %v337 = vunpack.c.l.bf16 %v135
  %v338 = vunpack.c.h.bf16 %v135
  %v339 = vunpack.c.l.bf16 %v136
  %v341 = vlaneseq
  %v342 = vshrl.u32 %v341, 7
  %v343 = vsub.s32 0, %v342
  %v344 = vrot.slane %v20, %v343
  %v345 = vlaneseq
  %v346 = vshrl.u32 %v345, 7
  %v347 = vsub.s32 1, %v346
  %v348 = vrot.slane %v20, %v347
  %v349 = vlaneseq
  %v350 = vshrl.u32 %v349, 7
  %v351 = vsub.s32 2, %v350
  %v352 = vrot.slane %v20, %v351
  %v353 = vlaneseq
  %v354 = vshrl.u32 %v353, 7
  %v355 = vsub.s32 3, %v354
  %v356 = vrot.slane %v20, %v355
  %v357 = vlaneseq
  %v358 = vshrl.u32 %v357, 7
  %v359 = vsub.s32 4, %v358
  %v360 = vrot.slane %v20, %v359
  %v361 = vlaneseq
  %v362 = vshrl.u32 %v361, 7
  %v363 = vsub.s32 5, %v362
  %v364 = vrot.slane %v20, %v363
  %v365 = vlaneseq
  %v366 = vshrl.u32 %v365, 7
  %v367 = vsub.s32 6, %v366
  %v368 = vrot.slane %v20, %v367
  %v376 = vmul.f32 %v137, %v344
  %v377 = vmul.f32 %v138, %v348
  %v378 = vmul.f32 %v139, %v352
  %v379 = vmul.f32 %v140, %v356
  %v380 = vmul.f32 %v141, %v360
  %v381 = vmul.f32 %v142, %v364
  %v382 = vmul.f32 %v143, %v368
  %v383 = vmul.f32 %v144, %v344
  %v384 = vmul.f32 %v145, %v348
  %v385 = vmul.f32 %v146, %v352
  %v386 = vmul.f32 %v147, %v356
  %v387 = vmul.f32 %v148, %v360
  %v388 = vmul.f32 %v149, %v364
  %v389 = vmul.f32 %v150, %v368
  %v390 = vmul.f32 %v151, %v344
  %v391 = vmul.f32 %v152, %v348
  %v392 = vmul.f32 %v153, %v352
  %v393 = vmul.f32 %v154, %v356
  %v394 = vmul.f32 %v155, %v360
  %v395 = vmul.f32 %v156, %v364
  %v396 = vmul.f32 %v157, %v368
  %v397 = vmul.f32 %v158, %v344
  %v398 = vmul.f32 %v159, %v348
  %v399 = vmul.f32 %v160, %v352
  %v400 = vmul.f32 %v161, %v356
  %v401 = vmul.f32 %v162, %v360
  %v402 = vmul.f32 %v163, %v364
  %v403 = vmul.f32 %v164, %v368
  %v404 = vmul.f32 %v165, %v344
  %v405 = vmul.f32 %v166, %v348
  %v406 = vmul.f32 %v167, %v352
  %v407 = vmul.f32 %v168, %v356
  %v408 = vmul.f32 %v169, %v360
  %v409 = vmul.f32 %v170, %v364
  %v410 = vmul.f32 %v171, %v368
  %v411 = vmul.f32 %v172, %v344
  %v412 = vmul.f32 %v173, %v348
  %v413 = vmul.f32 %v174, %v352
  %v414 = vmul.f32 %v175, %v356
  %v415 = vmul.f32 %v176, %v360
  %v416 = vmul.f32 %v177, %v364
  %v417 = vmul.f32 %v178, %v368
  %v418 = vmul.f32 %v179, %v344
  %v419 = vmul.f32 %v180, %v348
  %v420 = vmul.f32 %v181, %v352
  %v421 = vmul.f32 %v182, %v356
  %v422 = vmul.f32 %v183, %v360
  %v423 = vmul.f32 %v184, %v364
  %v424 = vmul.f32 %v185, %v368
  %v425 = vmul.f32 %v186, %v344
  %v426 = vmul.f32 %v187, %v348
  %v427 = vmul.f32 %v188, %v352
  %v428 = vmul.f32 %v189, %v356
  %v429 = vmul.f32 %v190, %v360
  %v430 = vmul.f32 %v191, %v364
  %v431 = vmul.f32 %v192, %v368
  %v432 = vmul.f32 %v193, %v344
  %v433 = vmul.f32 %v194, %v348
  %v434 = vmul.f32 %v195, %v352
  %v435 = vmul.f32 %v196, %v356
  %v436 = vmul.f32 %v197, %v360
  %v437 = vmul.f32 %v198, %v364
  %v438 = vmul.f32 %v199, %v368
  %v439 = vmul.f32 %v200, %v344
  %v440 = vmul.f32 %v201, %v348
  %v441 = vmul.f32 %v202, %v352
  %v442 = vmul.f32 %v203, %v356
  %v443 = vmul.f32 %v204, %v360
  %v444 = vmul.f32 %v205, %v364
  %v445 = vmul.f32 %v206, %v368
  %v446 = vmul.f32 %v207, %v344
  %v447 = vmul.f32 %v208, %v348
  %v448 = vmul.f32 %v209, %v352
  %v449 = vmul.f32 %v210, %v356
  %v450 = vmul.f32 %v211, %v360
  %v451 = vmul.f32 %v212, %v364
  %v452 = vmul.f32 %v213, %v368
  %v453 = vmul.f32 %v214, %v344
  %v454 = vmul.f32 %v215, %v348
  %v455 = vmul.f32 %v216, %v352
  %v456 = vmul.f32 %v217, %v356
  %v457 = vmul.f32 %v218, %v360
  %v458 = vmul.f32 %v219, %v364
  %v459 = vmul.f32 %v220, %v368
  %v460 = vmul.f32 %v221, %v344
  %v461 = vmul.f32 %v222, %v348
  %v462 = vmul.f32 %v223, %v352
  %v463 = vmul.f32 %v224, %v356
  %v464 = vmul.f32 %v225, %v360
  %v465 = vmul.f32 %v226, %v364
  %v466 = vmul.f32 %v227, %v368
  %v467 = vmul.f32 %v228, %v344
  %v468 = vmul.f32 %v229, %v348
  %v469 = vmul.f32 %v230, %v352
  %v470 = vmul.f32 %v231, %v356
  %v471 = vmul.f32 %v232, %v360
  %v472 = vmul.f32 %v233, %v364
  %v473 = vmul.f32 %v234, %v368
  %v474 = vmul.f32 %v235, %v344
  %v475 = vmul.f32 %v236, %v348
  %v476 = vmul.f32 %v237, %v352
  %v477 = vmul.f32 %v238, %v356
  %v478 = vmul.f32 %v239, %v360
  %v479 = vmul.f32 %v240, %v364
  %v480 = vmul.f32 %v241, %v368
  %v481 = vmul.f32 %v242, %v344
  %v482 = vmul.f32 %v243, %v348
  %v483 = vmul.f32 %v244, %v352
  %v484 = vmul.f32 %v245, %v356
  %v485 = vmul.f32 %v246, %v360
  %v486 = vmul.f32 %v247, %v364
  %v487 = vmul.f32 %v248, %v368
  %v488 = vmul.f32 %v249, %v344
  %v489 = vmul.f32 %v250, %v348
  %v490 = vmul.f32 %v251, %v352
  %v491 = vmul.f32 %v252, %v356
  %v492 = vmul.f32 %v253, %v360
  %v493 = vmul.f32 %v254, %v364
  %v494 = vmul.f32 %v255, %v368
  %v495 = vmul.f32 %v256, %v344
  %v496 = vmul.f32 %v257, %v348
  %v497 = vmul.f32 %v258, %v352
  %v498 = vmul.f32 %v259, %v356
  %v499 = vmul.f32 %v260, %v360
  %v500 = vmul.f32 %v261, %v364
  %v501 = vmul.f32 %v262, %v368
  %v502 = vmul.f32 %v263, %v344
  %v503 = vmul.f32 %v264, %v348
  %v504 = vmul.f32 %v265, %v352
  %v505 = vmul.f32 %v266, %v356
  %v506 = vmul.f32 %v267, %v360
  %v507 = vmul.f32 %v268, %v364
  %v508 = vmul.f32 %v269, %v368
  %v509 = vmul.f32 %v270, %v344
  %v510 = vmul.f32 %v271, %v348
  %v511 = vmul.f32 %v272, %v352
  %v512 = vmul.f32 %v273, %v356
  %v513 = vmul.f32 %v274, %v360
  %v514 = vmul.f32 %v275, %v364
  %v515 = vmul.f32 %v276, %v368
  %v516 = vmul.f32 %v277, %v344
  %v517 = vmul.f32 %v278, %v348
  %v518 = vmul.f32 %v279, %v352
  %v519 = vmul.f32 %v280, %v356
  %v520 = vmul.f32 %v281, %v360
  %v521 = vmul.f32 %v282, %v364
  %v522 = vmul.f32 %v283, %v368
  %v523 = vmul.f32 %v284, %v344
  %v524 = vmul.f32 %v285, %v348
  %v525 = vmul.f32 %v286, %v352
  %v526 = vmul.f32 %v287, %v356
  %v527 = vmul.f32 %v288, %v360
  %v528 = vmul.f32 %v289, %v364
  %v529 = vmul.f32 %v290, %v368
  %v530 = vmul.f32 %v291, %v344
  %v531 = vmul.f32 %v292, %v348
  %v532 = vmul.f32 %v293, %v352
  %v533 = vmul.f32 %v294, %v356
  %v534 = vmul.f32 %v295, %v360
  %v535 = vmul.f32 %v296, %v364
  %v536 = vmul.f32 %v297, %v368
  %v537 = vmul.f32 %v298, %v344
  %v538 = vmul.f32 %v299, %v348
  %v539 = vmul.f32 %v300, %v352
  %v540 = vmul.f32 %v301, %v356
  %v541 = vmul.f32 %v302, %v360
  %v542 = vmul.f32 %v303, %v364
  %v543 = vmul.f32 %v304, %v368
  %v544 = vmul.f32 %v305, %v344
  %v545 = vmul.f32 %v306, %v348
  %v546 = vmul.f32 %v307, %v352
  %v547 = vmul.f32 %v308, %v356
  %v548 = vmul.f32 %v309, %v360
  %v549 = vmul.f32 %v310, %v364
  %v550 = vmul.f32 %v311, %v368
  %v551 = vmul.f32 %v312, %v344
  %v552 = vmul.f32 %v313, %v348
  %v553 = vmul.f32 %v314, %v352
  %v554 = vmul.f32 %v315, %v356
  %v555 = vmul.f32 %v316, %v360
  %v556 = vmul.f32 %v317, %v364
  %v557 = vmul.f32 %v318, %v368
  %v558 = vmul.f32 %v319, %v344
  %v559 = vmul.f32 %v320, %v348
  %v560 = vmul.f32 %v321, %v352
  %v561 = vmul.f32 %v322, %v356
  %v562 = vmul.f32 %v323, %v360
  %v563 = vmul.f32 %v324, %v364
  %v564 = vmul.f32 %v325, %v368
  %v565 = vmul.f32 %v326, %v344
  %v566 = vmul.f32 %v327, %v348
  %v567 = vmul.f32 %v328, %v352
  %v568 = vmul.f32 %v329, %v356
  %v569 = vmul.f32 %v330, %v360
  %v570 = vmul.f32 %v331, %v364
  %v571 = vmul.f32 %v332, %v368
  %v572 = vmul.f32 %v333, %v344
  %v573 = vmul.f32 %v334, %v348
  %v574 = vmul.f32 %v335, %v352
  %v575 = vmul.f32 %v336, %v356
  %v576 = vmul.f32 %v337, %v360
  %v577 = vmul.f32 %v338, %v364
  %v578 = vmul.f32 %v339, %v368
  %v579 = vld [vmem:[%s1] sm:$0xff]
  %v580 = vld [vmem:[%s1 + $0x8] sm:$0xff]
  %v581 = vld [vmem:[%s1 + $0x10] sm:$0xff]
  %v582 = vld [vmem:[%s1 + $0x18] sm:$0xff]
  %v583 = vld [vmem:[%s1 + $0x20] sm:$0xff]
  %v584 = vld [vmem:[%s1 + $0x28] sm:$0xff]
  %v585 = vld [vmem:[%s1 + $0x30] sm:$0xff]
  %v586 = vld [vmem:[%s1 + $0x38] sm:$0xff]
  %v587 = vld [vmem:[%s1 + $0x40] sm:$0xff]
  %v588 = vld [vmem:[%s1 + $0x48] sm:$0xff]
  %v589 = vld [vmem:[%s1 + $0x50] sm:$0xff]
  %v590 = vld [vmem:[%s1 + $0x58] sm:$0xff]
  %v591 = vld [vmem:[%s1 + $0x60] sm:$0xff]
  %v592 = vld [vmem:[%s1 + $0x68] sm:$0xff]
  %v593 = vld [vmem:[%s1 + $0x70] sm:$0xff]
  %v594 = vld [vmem:[%s1 + $0x78] sm:$0xff]
  %v595 = vld [vmem:[%s1 + $0x80] sm:$0xff]
  %v596 = vld [vmem:[%s1 + $0x88] sm:$0xff]
  %v597 = vld [vmem:[%s1 + $0x90] sm:$0xff]
  %v598 = vld [vmem:[%s1 + $0x98] sm:$0xff]
  %v599 = vld [vmem:[%s1 + $0xa0] sm:$0xff]
  %v600 = vld [vmem:[%s1 + $0xa8] sm:$0xff]
  %v601 = vld [vmem:[%s1 + $0xb0] sm:$0xff]
  %v602 = vld [vmem:[%s1 + $0xb8] sm:$0xff]
  %v603 = vld [vmem:[%s1 + $0xc0] sm:$0xff]
  %v604 = vld [vmem:[%s1 + $0xc8] sm:$0xff]
  %v605 = vld [vmem:[%s1 + $0xd0] sm:$0xff]
  %v606 = vld [vmem:[%s1 + $0xd8] sm:$0xff]
  %v607 = vld [vmem:[%s1 + $0xe0] sm:$0xff]
  %v608 = vld [vmem:[%s1 + $0xe8] sm:$0xff]
  %v609 = vld [vmem:[%s1 + $0xf0] sm:$0xff]
  %v610 = vld [vmem:[%s1 + $0xf8] sm:$0xff]
  %v611 = vld [vmem:[%s1 + $0x100] sm:$0xff]
  %v612 = vld [vmem:[%s1 + $0x108] sm:$0xff]
  %v613 = vld [vmem:[%s1 + $0x110] sm:$0xff]
  %v614 = vld [vmem:[%s1 + $0x118] sm:$0xff]
  %v615 = vld [vmem:[%s1 + $0x120] sm:$0xff]
  %v616 = vld [vmem:[%s1 + $0x128] sm:$0xff]
  %v617 = vld [vmem:[%s1 + $0x130] sm:$0xff]
  %v618 = vld [vmem:[%s1 + $0x138] sm:$0xff]
  %v619 = vld [vmem:[%s1 + $0x140] sm:$0xff]
  %v620 = vld [vmem:[%s1 + $0x148] sm:$0xff]
  %v621 = vld [vmem:[%s1 + $0x150] sm:$0xff]
  %v622 = vld [vmem:[%s1 + $0x158] sm:$0xff]
  %v623 = vld [vmem:[%s1 + $0x160] sm:$0xff]
  %v624 = vld [vmem:[%s1 + $0x168] sm:$0xff]
  %v625 = vld [vmem:[%s1 + $0x170] sm:$0xff]
  %v626 = vld [vmem:[%s1 + $0x178] sm:$0xff]
  %v627 = vld [vmem:[%s1 + $0x180] sm:$0xff]
  %v628 = vld [vmem:[%s1 + $0x188] sm:$0xff]
  %v629 = vld [vmem:[%s1 + $0x190] sm:$0xff]
  %v630 = vld [vmem:[%s1 + $0x198] sm:$0xff]
  %v631 = vld [vmem:[%s1 + $0x1a0] sm:$0xff]
  %v632 = vld [vmem:[%s1 + $0x1a8] sm:$0xff]
  %v633 = vld [vmem:[%s1 + $0x1b0] sm:$0xff]
  %v634 = vld [vmem:[%s1 + $0x1b8] sm:$0xff]
  %v635 = vld [vmem:[%s1 + $0x1c0] sm:$0xff]
  %v636 = vld [vmem:[%s1 + $0x1c8] sm:$0xff]
  %v637 = vld [vmem:[%s1 + $0x1d0] sm:$0xff]
  %v638 = vld [vmem:[%s1 + $0x1d8] sm:$0xff]
  %v639 = vld [vmem:[%s1 + $0x1e0] sm:$0xff]
  %v640 = vld [vmem:[%s1 + $0x1e8] sm:$0xff]
  %v641 = vld [vmem:[%s1 + $0x1f0] sm:$0xff]
  %v642 = vld [vmem:[%s1 + $0x1f8] sm:$0xff]
  %v643 = vld [vmem:[%s1 + $0x200] sm:$0xff]
  %v644 = vld [vmem:[%s1 + $0x208] sm:$0xff]
  %v645 = vld [vmem:[%s1 + $0x210] sm:$0xff]
  %v646 = vld [vmem:[%s1 + $0x218] sm:$0xff]
  %v647 = vld [vmem:[%s1 + $0x220] sm:$0xff]
  %v648 = vld [vmem:[%s1 + $0x228] sm:$0xff]
  %v649 = vld [vmem:[%s1 + $0x230] sm:$0xff]
  %v650 = vld [vmem:[%s1 + $0x238] sm:$0xff]
  %v651 = vld [vmem:[%s1 + $0x240] sm:$0xff]
  %v652 = vld [vmem:[%s1 + $0x248] sm:$0xff]
  %v653 = vld [vmem:[%s1 + $0x250] sm:$0xff]
  %v654 = vld [vmem:[%s1 + $0x258] sm:$0xff]
  %v655 = vld [vmem:[%s1 + $0x260] sm:$0xff]
  %v656 = vld [vmem:[%s1 + $0x268] sm:$0xff]
  %v657 = vld [vmem:[%s1 + $0x270] sm:$0xff]
  %v658 = vld [vmem:[%s1 + $0x278] sm:$0xff]
  %v659 = vld [vmem:[%s1 + $0x280] sm:$0xff]
  %v660 = vld [vmem:[%s1 + $0x288] sm:$0xff]
  %v661 = vld [vmem:[%s1 + $0x290] sm:$0xff]
  %v662 = vld [vmem:[%s1 + $0x298] sm:$0xff]
  %v663 = vld [vmem:[%s1 + $0x2a0] sm:$0xff]
  %v664 = vld [vmem:[%s1 + $0x2a8] sm:$0xff]
  %v665 = vld [vmem:[%s1 + $0x2b0] sm:$0xff]
  %v666 = vld [vmem:[%s1 + $0x2b8] sm:$0xff]
  %v667 = vld [vmem:[%s1 + $0x2c0] sm:$0xff]
  %v668 = vld [vmem:[%s1 + $0x2c8] sm:$0xff]
  %v669 = vld [vmem:[%s1 + $0x2d0] sm:$0xff]
  %v670 = vld [vmem:[%s1 + $0x2d8] sm:$0xff]
  %v671 = vld [vmem:[%s1 + $0x2e0] sm:$0xff]
  %v672 = vld [vmem:[%s1 + $0x2e8] sm:$0xff]
  %v673 = vld [vmem:[%s1 + $0x2f0] sm:$0xff]
  %v674 = vld [vmem:[%s1 + $0x2f8] sm:$0xff]
  %v675 = vld [vmem:[%s1 + $0x300] sm:$0xff]
  %v676 = vld [vmem:[%s1 + $0x308] sm:$0xff]
  %v677 = vld [vmem:[%s1 + $0x310] sm:$0xff]
  %v678 = vld [vmem:[%s1 + $0x318] sm:$0xff]
  %v679 = vld [vmem:[%s1 + $0x320] sm:$0xff]
  %v680 = vld [vmem:[%s1 + $0x328] sm:$0xff]
  %vm681 = vcmask 392192
  %v683 = vsel %vm681, %v382, 0
  %v686 = vsel %vm681, %v389, 0
  %v689 = vsel %vm681, %v396, 0
  %v692 = vsel %vm681, %v403, 0
  %v695 = vsel %vm681, %v410, 0
  %v698 = vsel %vm681, %v417, 0
  %v701 = vsel %vm681, %v424, 0
  %v704 = vsel %vm681, %v431, 0
  %v707 = vsel %vm681, %v438, 0
  %v710 = vsel %vm681, %v445, 0
  %v713 = vsel %vm681, %v452, 0
  %v716 = vsel %vm681, %v459, 0
  %v719 = vsel %vm681, %v466, 0
  %v722 = vsel %vm681, %v473, 0
  %v725 = vsel %vm681, %v480, 0
  %v728 = vsel %vm681, %v487, 0
  %v731 = vsel %vm681, %v494, 0
  %v734 = vsel %vm681, %v501, 0
  %v737 = vsel %vm681, %v508, 0
  %v740 = vsel %vm681, %v515, 0
  %v743 = vsel %vm681, %v522, 0
  %v746 = vsel %vm681, %v529, 0
  %v749 = vsel %vm681, %v536, 0
  %v752 = vsel %vm681, %v543, 0
  %v755 = vsel %vm681, %v550, 0
  %v758 = vsel %vm681, %v557, 0
  %v761 = vsel %vm681, %v564, 0
  %v764 = vsel %vm681, %v571, 0
  %v767 = vsel %vm681, %v578, 0
  %769 = vmatprep.subr.mxu0 0.0
  %770 = vmatpush1.msra.mxu0 %v594
  %771 = vmatprep.subr.mxu0 0.0
  %772 = vmatpush1.msra.mxu0 %v593
  %773 = vmatprep.subr.mxu0 0.0
  %774 = vmatpush1.msra.mxu0 %v592
  %775 = vmatprep.subr.mxu0 0.0
  %776 = vmatpush1.msra.mxu0 %v591
  %777 = vmatprep.subr.mxu0 0.0
  %778 = vmatpush1.msra.mxu0 %v590
  %779 = vmatprep.subr.mxu0 0.0
  %780 = vmatpush1.msra.mxu0 %v589
  %781 = vmatprep.subr.mxu0 0.0
  %782 = vmatpush1.msra.mxu0 %v588
  %783 = vmatprep.subr.mxu0 0.0
  %784 = vmatpush1.msra.mxu0 %v587
  %785 = vmatprep.subr.mxu0 0.0
  %786 = vmatpush1.msra.mxu0 %v586
  %787 = vmatprep.subr.mxu0 0.0
  %788 = vmatpush1.msra.mxu0 %v585
  %789 = vmatprep.subr.mxu0 0.0
  %790 = vmatpush1.msra.mxu0 %v584
  %791 = vmatprep.subr.mxu0 0.0
  %792 = vmatpush1.msra.mxu0 %v583
  %793 = vmatprep.subr.mxu0 0.0
  %794 = vmatpush1.msra.mxu0 %v582
  %795 = vmatprep.subr.mxu0 0.0
  %796 = vmatpush1.msra.mxu0 %v581
  %797 = vmatprep.subr.mxu0 0.0
  %798 = vmatpush1.msra.mxu0 %v580
  %799 = vmatprep.subr.mxu0 0.0
  %800 = vmatpush1.msra.mxu0 %v579
  %801 = vmatprep.subr.mxu0 0.0
  %802 = vmatpush2.msra.mxu0 %v610
  %803 = vmatprep.subr.mxu0 0.0
  %804 = vmatpush2.msra.mxu0 %v609
  %805 = vmatprep.subr.mxu0 0.0
  %806 = vmatpush2.msra.mxu0 %v608
  %807 = vmatprep.subr.mxu0 0.0
  %808 = vmatpush2.msra.mxu0 %v607
  %809 = vmatprep.subr.mxu0 0.0
  %810 = vmatpush2.msra.mxu0 %v606
  %811 = vmatprep.subr.mxu0 0.0
  %812 = vmatpush2.msra.mxu0 %v605
  %813 = vmatprep.subr.mxu0 0.0
  %814 = vmatpush2.msra.mxu0 %v604
  %815 = vmatprep.subr.mxu0 0.0
  %816 = vmatpush2.msra.mxu0 %v603
  %817 = vmatprep.subr.mxu0 0.0
  %818 = vmatpush2.msra.mxu0 %v602
  %819 = vmatprep.subr.mxu0 0.0
  %820 = vmatpush2.msra.mxu0 %v601
  %821 = vmatprep.subr.mxu0 0.0
  %822 = vmatpush2.msra.mxu0 %v600
  %823 = vmatprep.subr.mxu0 0.0
  %824 = vmatpush2.msra.mxu0 %v599
  %825 = vmatprep.subr.mxu0 0.0
  %826 = vmatpush2.msra.mxu0 %v598
  %827 = vmatprep.subr.mxu0 0.0
  %828 = vmatpush2.msra.mxu0 %v597
  %829 = vmatprep.subr.mxu0 0.0
  %830 = vmatpush2.msra.mxu0 %v596
  %831 = vmatprep.subr.mxu0 0.0
  %832 = vmatpush2.msra.mxu0 %v595
  %833 = vmatprep.mubr.f32.mxu0 %v377
  %834 = vmatmul.mubr.f32.gmra.mxu0 %v376
  %v835 = vpop.f32.mrf.mxu0
  %v836 = vadd.f32 0.0, %v835
  %v837 = vpop.f32.mrf.mxu0
  %838 = vmatprep.mubr.f32.mxu0 %v384
  %839 = vmatmul.mubr.f32.gmra.mxu0 %v383
  %v840 = vpop.f32.mrf.mxu0
  %v841 = vadd.f32 0.0, %v840
  %v842 = vpop.f32.mrf.mxu0
  %843 = vmatprep.mubr.f32.mxu0 %v391
  %844 = vmatmul.mubr.f32.gmra.mxu0 %v390
  %v845 = vpop.f32.mrf.mxu0
  %v846 = vadd.f32 0.0, %v845
  %v847 = vpop.f32.mrf.mxu0
  %848 = vmatprep.mubr.f32.mxu0 %v398
  %849 = vmatmul.mubr.f32.gmra.mxu0 %v397
  %v850 = vpop.f32.mrf.mxu0
  %v851 = vadd.f32 0.0, %v850
  %v852 = vpop.f32.mrf.mxu0
  %853 = vmatprep.mubr.f32.mxu0 %v405
  %854 = vmatmul.mubr.f32.gmra.mxu0 %v404
  %v855 = vpop.f32.mrf.mxu0
  %v856 = vadd.f32 0.0, %v855
  %v857 = vpop.f32.mrf.mxu0
  %858 = vmatprep.mubr.f32.mxu0 %v412
  %859 = vmatmul.mubr.f32.gmra.mxu0 %v411
  %v860 = vpop.f32.mrf.mxu0
  %v861 = vadd.f32 0.0, %v860
  %v862 = vpop.f32.mrf.mxu0
  %863 = vmatprep.mubr.f32.mxu0 %v419
  %864 = vmatmul.mubr.f32.gmra.mxu0 %v418
  %v865 = vpop.f32.mrf.mxu0
  %v866 = vadd.f32 0.0, %v865
  %v867 = vpop.f32.mrf.mxu0
  %868 = vmatprep.mubr.f32.mxu0 %v426
  %869 = vmatmul.mubr.f32.gmra.mxu0 %v425
  %v870 = vpop.f32.mrf.mxu0
  %v871 = vadd.f32 0.0, %v870
  %v872 = vpop.f32.mrf.mxu0
  %873 = vmatprep.mubr.f32.mxu0 %v433
  %874 = vmatmul.mubr.f32.gmra.mxu0 %v432
  %v875 = vpop.f32.mrf.mxu0
  %v876 = vadd.f32 0.0, %v875
  %v877 = vpop.f32.mrf.mxu0
  %878 = vmatprep.mubr.f32.mxu0 %v440
  %879 = vmatmul.mubr.f32.gmra.mxu0 %v439
  %v880 = vpop.f32.mrf.mxu0
  %v881 = vadd.f32 0.0, %v880
  %v882 = vpop.f32.mrf.mxu0
  %883 = vmatprep.mubr.f32.mxu0 %v447
  %884 = vmatmul.mubr.f32.gmra.mxu0 %v446
  %v885 = vpop.f32.mrf.mxu0
  %v886 = vadd.f32 0.0, %v885
  %v887 = vpop.f32.mrf.mxu0
  %888 = vmatprep.mubr.f32.mxu0 %v454
  %889 = vmatmul.mubr.f32.gmra.mxu0 %v453
  %v890 = vpop.f32.mrf.mxu0
  %v891 = vadd.f32 0.0, %v890
  %v892 = vpop.f32.mrf.mxu0
  %893 = vmatprep.mubr.f32.mxu0 %v461
  %894 = vmatmul.mubr.f32.gmra.mxu0 %v460
  %v895 = vpop.f32.mrf.mxu0
  %v896 = vadd.f32 0.0, %v895
  %v897 = vpop.f32.mrf.mxu0
  %898 = vmatprep.mubr.f32.mxu0 %v468
  %899 = vmatmul.mubr.f32.gmra.mxu0 %v467
  %v900 = vpop.f32.mrf.mxu0
  %v901 = vadd.f32 0.0, %v900
  %v902 = vpop.f32.mrf.mxu0
  %903 = vmatprep.mubr.f32.mxu0 %v475
  %904 = vmatmul.mubr.f32.gmra.mxu0 %v474
  %v905 = vpop.f32.mrf.mxu0
  %v906 = vadd.f32 0.0, %v905
  %v907 = vpop.f32.mrf.mxu0
  %908 = vmatprep.mubr.f32.mxu0 %v482
  %909 = vmatmul.mubr.f32.gmra.mxu0 %v481
  %v910 = vpop.f32.mrf.mxu0
  %v911 = vadd.f32 0.0, %v910
  %v912 = vpop.f32.mrf.mxu0
  %913 = vmatprep.mubr.f32.mxu0 %v489
  %914 = vmatmul.mubr.f32.gmra.mxu0 %v488
  %v915 = vpop.f32.mrf.mxu0
  %v916 = vadd.f32 0.0, %v915
  %v917 = vpop.f32.mrf.mxu0
  %918 = vmatprep.mubr.f32.mxu0 %v496
  %919 = vmatmul.mubr.f32.gmra.mxu0 %v495
  %v920 = vpop.f32.mrf.mxu0
  %v921 = vadd.f32 0.0, %v920
  %v922 = vpop.f32.mrf.mxu0
  %923 = vmatprep.mubr.f32.mxu0 %v503
  %924 = vmatmul.mubr.f32.gmra.mxu0 %v502
  %v925 = vpop.f32.mrf.mxu0
  %v926 = vadd.f32 0.0, %v925
  %v927 = vpop.f32.mrf.mxu0
  %928 = vmatprep.mubr.f32.mxu0 %v510
  %929 = vmatmul.mubr.f32.gmra.mxu0 %v509
  %v930 = vpop.f32.mrf.mxu0
  %v931 = vadd.f32 0.0, %v930
  %v932 = vpop.f32.mrf.mxu0
  %933 = vmatprep.mubr.f32.mxu0 %v517
  %934 = vmatmul.mubr.f32.gmra.mxu0 %v516
  %v935 = vpop.f32.mrf.mxu0
  %v936 = vadd.f32 0.0, %v935
  %v937 = vpop.f32.mrf.mxu0
  %938 = vmatprep.mubr.f32.mxu0 %v524
  %939 = vmatmul.mubr.f32.gmra.mxu0 %v523
  %v940 = vpop.f32.mrf.mxu0
  %v941 = vadd.f32 0.0, %v940
  %v942 = vpop.f32.mrf.mxu0
  %943 = vmatprep.mubr.f32.mxu0 %v531
  %944 = vmatmul.mubr.f32.gmra.mxu0 %v530
  %v945 = vpop.f32.mrf.mxu0
  %v946 = vadd.f32 0.0, %v945
  %v947 = vpop.f32.mrf.mxu0
  %948 = vmatprep.mubr.f32.mxu0 %v538
  %949 = vmatmul.mubr.f32.gmra.mxu0 %v537
  %v950 = vpop.f32.mrf.mxu0
  %v951 = vadd.f32 0.0, %v950
  %v952 = vpop.f32.mrf.mxu0
  %953 = vmatprep.mubr.f32.mxu0 %v545
  %954 = vmatmul.mubr.f32.gmra.mxu0 %v544
  %v955 = vpop.f32.mrf.mxu0
  %v956 = vadd.f32 0.0, %v955
  %v957 = vpop.f32.mrf.mxu0
  %958 = vmatprep.mubr.f32.mxu0 %v552
  %959 = vmatmul.mubr.f32.gmra.mxu0 %v551
  %v960 = vpop.f32.mrf.mxu0
  %v961 = vadd.f32 0.0, %v960
  %v962 = vpop.f32.mrf.mxu0
  %963 = vmatprep.mubr.f32.mxu0 %v559
  %964 = vmatmul.mubr.f32.gmra.mxu0 %v558
  %v965 = vpop.f32.mrf.mxu0
  %v966 = vadd.f32 0.0, %v965
  %v967 = vpop.f32.mrf.mxu0
  %968 = vmatprep.mubr.f32.mxu0 %v566
  %969 = vmatmul.mubr.f32.gmra.mxu0 %v565
  %v970 = vpop.f32.mrf.mxu0
  %v971 = vadd.f32 0.0, %v970
  %v972 = vpop.f32.mrf.mxu0
  %973 = vmatprep.mubr.f32.mxu0 %v573
  %974 = vmatmul.mubr.f32.gmra.mxu0 %v572
  %v975 = vpop.f32.mrf.mxu0
  %v976 = vadd.f32 0.0, %v975
  %v977 = vpop.f32.mrf.mxu0
  %978 = vdwg.mxu0
  %979 = vmatprep.subr.mxu0 0.0
  %980 = vmatpush1.msra.mxu0 %v626
  %981 = vmatprep.subr.mxu0 0.0
  %982 = vmatpush1.msra.mxu0 %v625
  %983 = vmatprep.subr.mxu0 0.0
  %984 = vmatpush1.msra.mxu0 %v624
  %985 = vmatprep.subr.mxu0 0.0
  %986 = vmatpush1.msra.mxu0 %v623
  %987 = vmatprep.subr.mxu0 0.0
  %988 = vmatpush1.msra.mxu0 %v622
  %989 = vmatprep.subr.mxu0 0.0
  %990 = vmatpush1.msra.mxu0 %v621
  %991 = vmatprep.subr.mxu0 0.0
  %992 = vmatpush1.msra.mxu0 %v620
  %993 = vmatprep.subr.mxu0 0.0
  %994 = vmatpush1.msra.mxu0 %v619
  %995 = vmatprep.subr.mxu0 0.0
  %996 = vmatpush1.msra.mxu0 %v618
  %997 = vmatprep.subr.mxu0 0.0
  %998 = vmatpush1.msra.mxu0 %v617
  %999 = vmatprep.subr.mxu0 0.0
  %1000 = vmatpush1.msra.mxu0 %v616
  %1001 = vmatprep.subr.mxu0 0.0
  %1002 = vmatpush1.msra.mxu0 %v615
  %1003 = vmatprep.subr.mxu0 0.0
  %1004 = vmatpush1.msra.mxu0 %v614
  %1005 = vmatprep.subr.mxu0 0.0
  %1006 = vmatpush1.msra.mxu0 %v613
  %1007 = vmatprep.subr.mxu0 0.0
  %1008 = vmatpush1.msra.mxu0 %v612
  %1009 = vmatprep.subr.mxu0 0.0
  %1010 = vmatpush1.msra.mxu0 %v611
  %1011 = vmatprep.subr.mxu0 0.0
  %1012 = vmatpush2.msra.mxu0 %v642
  %1013 = vmatprep.subr.mxu0 0.0
  %1014 = vmatpush2.msra.mxu0 %v641
  %1015 = vmatprep.subr.mxu0 0.0
  %1016 = vmatpush2.msra.mxu0 %v640
  %1017 = vmatprep.subr.mxu0 0.0
  %1018 = vmatpush2.msra.mxu0 %v639
  %1019 = vmatprep.subr.mxu0 0.0
  %1020 = vmatpush2.msra.mxu0 %v638
  %1021 = vmatprep.subr.mxu0 0.0
  %1022 = vmatpush2.msra.mxu0 %v637
  %1023 = vmatprep.subr.mxu0 0.0
  %1024 = vmatpush2.msra.mxu0 %v636
  %1025 = vmatprep.subr.mxu0 0.0
  %1026 = vmatpush2.msra.mxu0 %v635
  %1027 = vmatprep.subr.mxu0 0.0
  %1028 = vmatpush2.msra.mxu0 %v634
  %1029 = vmatprep.subr.mxu0 0.0
  %1030 = vmatpush2.msra.mxu0 %v633
  %1031 = vmatprep.subr.mxu0 0.0
  %1032 = vmatpush2.msra.mxu0 %v632
  %1033 = vmatprep.subr.mxu0 0.0
  %1034 = vmatpush2.msra.mxu0 %v631
  %1035 = vmatprep.subr.mxu0 0.0
  %1036 = vmatpush2.msra.mxu0 %v630
  %1037 = vmatprep.subr.mxu0 0.0
  %1038 = vmatpush2.msra.mxu0 %v629
  %1039 = vmatprep.subr.mxu0 0.0
  %1040 = vmatpush2.msra.mxu0 %v628
  %1041 = vmatprep.subr.mxu0 0.0
  %1042 = vmatpush2.msra.mxu0 %v627
  %1043 = vmatprep.mubr.f32.mxu0 %v379
  %1044 = vmatmul.mubr.f32.gmra.mxu0 %v378
  %v1045 = vpop.f32.mrf.mxu0
  %v1046 = vadd.f32 %v836, %v1045
  %v1047 = vpop.f32.mrf.mxu0
  %1048 = vmatprep.mubr.f32.mxu0 %v386
  %1049 = vmatmul.mubr.f32.gmra.mxu0 %v385
  %v1050 = vpop.f32.mrf.mxu0
  %v1051 = vadd.f32 %v841, %v1050
  %v1052 = vpop.f32.mrf.mxu0
  %1053 = vmatprep.mubr.f32.mxu0 %v393
  %1054 = vmatmul.mubr.f32.gmra.mxu0 %v392
  %v1055 = vpop.f32.mrf.mxu0
  %v1056 = vadd.f32 %v846, %v1055
  %v1057 = vpop.f32.mrf.mxu0
  %1058 = vmatprep.mubr.f32.mxu0 %v400
  %1059 = vmatmul.mubr.f32.gmra.mxu0 %v399
  %v1060 = vpop.f32.mrf.mxu0
  %v1061 = vadd.f32 %v851, %v1060
  %v1062 = vpop.f32.mrf.mxu0
  %1063 = vmatprep.mubr.f32.mxu0 %v407
  %1064 = vmatmul.mubr.f32.gmra.mxu0 %v406
  %v1065 = vpop.f32.mrf.mxu0
  %v1066 = vadd.f32 %v856, %v1065
  %v1067 = vpop.f32.mrf.mxu0
  %1068 = vmatprep.mubr.f32.mxu0 %v414
  %1069 = vmatmul.mubr.f32.gmra.mxu0 %v413
  %v1070 = vpop.f32.mrf.mxu0
  %v1071 = vadd.f32 %v861, %v1070
  %v1072 = vpop.f32.mrf.mxu0
  %1073 = vmatprep.mubr.f32.mxu0 %v421
  %1074 = vmatmul.mubr.f32.gmra.mxu0 %v420
  %v1075 = vpop.f32.mrf.mxu0
  %v1076 = vadd.f32 %v866, %v1075
  %v1077 = vpop.f32.mrf.mxu0
  %1078 = vmatprep.mubr.f32.mxu0 %v428
  %1079 = vmatmul.mubr.f32.gmra.mxu0 %v427
  %v1080 = vpop.f32.mrf.mxu0
  %v1081 = vadd.f32 %v871, %v1080
  %v1082 = vpop.f32.mrf.mxu0
  %1083 = vmatprep.mubr.f32.mxu0 %v435
  %1084 = vmatmul.mubr.f32.gmra.mxu0 %v434
  %v1085 = vpop.f32.mrf.mxu0
  %v1086 = vadd.f32 %v876, %v1085
  %v1087 = vpop.f32.mrf.mxu0
  %1088 = vmatprep.mubr.f32.mxu0 %v442
  %1089 = vmatmul.mubr.f32.gmra.mxu0 %v441
  %v1090 = vpop.f32.mrf.mxu0
  %v1091 = vadd.f32 %v881, %v1090
  %v1092 = vpop.f32.mrf.mxu0
  %1093 = vmatprep.mubr.f32.mxu0 %v449
  %1094 = vmatmul.mubr.f32.gmra.mxu0 %v448
  %v1095 = vpop.f32.mrf.mxu0
  %v1096 = vadd.f32 %v886, %v1095
  %v1097 = vpop.f32.mrf.mxu0
  %1098 = vmatprep.mubr.f32.mxu0 %v456
  %1099 = vmatmul.mubr.f32.gmra.mxu0 %v455
  %v1100 = vpop.f32.mrf.mxu0
  %v1101 = vadd.f32 %v891, %v1100
  %v1102 = vpop.f32.mrf.mxu0
  %1103 = vmatprep.mubr.f32.mxu0 %v463
  %1104 = vmatmul.mubr.f32.gmra.mxu0 %v462
  %v1105 = vpop.f32.mrf.mxu0
  %v1106 = vadd.f32 %v896, %v1105
  %v1107 = vpop.f32.mrf.mxu0
  %1108 = vmatprep.mubr.f32.mxu0 %v470
  %1109 = vmatmul.mubr.f32.gmra.mxu0 %v469
  %v1110 = vpop.f32.mrf.mxu0
  %v1111 = vadd.f32 %v901, %v1110
  %v1112 = vpop.f32.mrf.mxu0
  %1113 = vmatprep.mubr.f32.mxu0 %v477
  %1114 = vmatmul.mubr.f32.gmra.mxu0 %v476
  %v1115 = vpop.f32.mrf.mxu0
  %v1116 = vadd.f32 %v906, %v1115
  %v1117 = vpop.f32.mrf.mxu0
  %1118 = vmatprep.mubr.f32.mxu0 %v484
  %1119 = vmatmul.mubr.f32.gmra.mxu0 %v483
  %v1120 = vpop.f32.mrf.mxu0
  %v1121 = vadd.f32 %v911, %v1120
  %v1122 = vpop.f32.mrf.mxu0
  %1123 = vmatprep.mubr.f32.mxu0 %v491
  %1124 = vmatmul.mubr.f32.gmra.mxu0 %v490
  %v1125 = vpop.f32.mrf.mxu0
  %v1126 = vadd.f32 %v916, %v1125
  %v1127 = vpop.f32.mrf.mxu0
  %1128 = vmatprep.mubr.f32.mxu0 %v498
  %1129 = vmatmul.mubr.f32.gmra.mxu0 %v497
  %v1130 = vpop.f32.mrf.mxu0
  %v1131 = vadd.f32 %v921, %v1130
  %v1132 = vpop.f32.mrf.mxu0
  %1133 = vmatprep.mubr.f32.mxu0 %v505
  %1134 = vmatmul.mubr.f32.gmra.mxu0 %v504
  %v1135 = vpop.f32.mrf.mxu0
  %v1136 = vadd.f32 %v926, %v1135
  %v1137 = vpop.f32.mrf.mxu0
  %1138 = vmatprep.mubr.f32.mxu0 %v512
  %1139 = vmatmul.mubr.f32.gmra.mxu0 %v511
  %v1140 = vpop.f32.mrf.mxu0
  %v1141 = vadd.f32 %v931, %v1140
  %v1142 = vpop.f32.mrf.mxu0
  %1143 = vmatprep.mubr.f32.mxu0 %v519
  %1144 = vmatmul.mubr.f32.gmra.mxu0 %v518
  %v1145 = vpop.f32.mrf.mxu0
  %v1146 = vadd.f32 %v936, %v1145
  %v1147 = vpop.f32.mrf.mxu0
  %1148 = vmatprep.mubr.f32.mxu0 %v526
  %1149 = vmatmul.mubr.f32.gmra.mxu0 %v525
  %v1150 = vpop.f32.mrf.mxu0
  %v1151 = vadd.f32 %v941, %v1150
  %v1152 = vpop.f32.mrf.mxu0
  %1153 = vmatprep.mubr.f32.mxu0 %v533
  %1154 = vmatmul.mubr.f32.gmra.mxu0 %v532
  %v1155 = vpop.f32.mrf.mxu0
  %v1156 = vadd.f32 %v946, %v1155
  %v1157 = vpop.f32.mrf.mxu0
  %1158 = vmatprep.mubr.f32.mxu0 %v540
  %1159 = vmatmul.mubr.f32.gmra.mxu0 %v539
  %v1160 = vpop.f32.mrf.mxu0
  %v1161 = vadd.f32 %v951, %v1160
  %v1162 = vpop.f32.mrf.mxu0
  %1163 = vmatprep.mubr.f32.mxu0 %v547
  %1164 = vmatmul.mubr.f32.gmra.mxu0 %v546
  %v1165 = vpop.f32.mrf.mxu0
  %v1166 = vadd.f32 %v956, %v1165
  %v1167 = vpop.f32.mrf.mxu0
  %1168 = vmatprep.mubr.f32.mxu0 %v554
  %1169 = vmatmul.mubr.f32.gmra.mxu0 %v553
  %v1170 = vpop.f32.mrf.mxu0
  %v1171 = vadd.f32 %v961, %v1170
  %v1172 = vpop.f32.mrf.mxu0
  %1173 = vmatprep.mubr.f32.mxu0 %v561
  %1174 = vmatmul.mubr.f32.gmra.mxu0 %v560
  %v1175 = vpop.f32.mrf.mxu0
  %v1176 = vadd.f32 %v966, %v1175
  %v1177 = vpop.f32.mrf.mxu0
  %1178 = vmatprep.mubr.f32.mxu0 %v568
  %1179 = vmatmul.mubr.f32.gmra.mxu0 %v567
  %v1180 = vpop.f32.mrf.mxu0
  %v1181 = vadd.f32 %v971, %v1180
  %v1182 = vpop.f32.mrf.mxu0
  %1183 = vmatprep.mubr.f32.mxu0 %v575
  %1184 = vmatmul.mubr.f32.gmra.mxu0 %v574
  %v1185 = vpop.f32.mrf.mxu0
  %v1186 = vadd.f32 %v976, %v1185
  %v1187 = vpop.f32.mrf.mxu0
  %1188 = vdwg.mxu0
  %1189 = vmatprep.subr.mxu0 0.0
  %1190 = vmatpush1.msra.mxu0 %v658
  %1191 = vmatprep.subr.mxu0 0.0
  %1192 = vmatpush1.msra.mxu0 %v657
  %1193 = vmatprep.subr.mxu0 0.0
  %1194 = vmatpush1.msra.mxu0 %v656
  %1195 = vmatprep.subr.mxu0 0.0
  %1196 = vmatpush1.msra.mxu0 %v655
  %1197 = vmatprep.subr.mxu0 0.0
  %1198 = vmatpush1.msra.mxu0 %v654
  %1199 = vmatprep.subr.mxu0 0.0
  %1200 = vmatpush1.msra.mxu0 %v653
  %1201 = vmatprep.subr.mxu0 0.0
  %1202 = vmatpush1.msra.mxu0 %v652
  %1203 = vmatprep.subr.mxu0 0.0
  %1204 = vmatpush1.msra.mxu0 %v651
  %1205 = vmatprep.subr.mxu0 0.0
  %1206 = vmatpush1.msra.mxu0 %v650
  %1207 = vmatprep.subr.mxu0 0.0
  %1208 = vmatpush1.msra.mxu0 %v649
  %1209 = vmatprep.subr.mxu0 0.0
  %1210 = vmatpush1.msra.mxu0 %v648
  %1211 = vmatprep.subr.mxu0 0.0
  %1212 = vmatpush1.msra.mxu0 %v647
  %1213 = vmatprep.subr.mxu0 0.0
  %1214 = vmatpush1.msra.mxu0 %v646
  %1215 = vmatprep.subr.mxu0 0.0
  %1216 = vmatpush1.msra.mxu0 %v645
  %1217 = vmatprep.subr.mxu0 0.0
  %1218 = vmatpush1.msra.mxu0 %v644
  %1219 = vmatprep.subr.mxu0 0.0
  %1220 = vmatpush1.msra.mxu0 %v643
  %1221 = vmatprep.subr.mxu0 0.0
  %1222 = vmatpush2.msra.mxu0 %v674
  %1223 = vmatprep.subr.mxu0 0.0
  %1224 = vmatpush2.msra.mxu0 %v673
  %1225 = vmatprep.subr.mxu0 0.0
  %1226 = vmatpush2.msra.mxu0 %v672
  %1227 = vmatprep.subr.mxu0 0.0
  %1228 = vmatpush2.msra.mxu0 %v671
  %1229 = vmatprep.subr.mxu0 0.0
  %1230 = vmatpush2.msra.mxu0 %v670
  %1231 = vmatprep.subr.mxu0 0.0
  %1232 = vmatpush2.msra.mxu0 %v669
  %1233 = vmatprep.subr.mxu0 0.0
  %1234 = vmatpush2.msra.mxu0 %v668
  %1235 = vmatprep.subr.mxu0 0.0
  %1236 = vmatpush2.msra.mxu0 %v667
  %1237 = vmatprep.subr.mxu0 0.0
  %1238 = vmatpush2.msra.mxu0 %v666
  %1239 = vmatprep.subr.mxu0 0.0
  %1240 = vmatpush2.msra.mxu0 %v665
  %1241 = vmatprep.subr.mxu0 0.0
  %1242 = vmatpush2.msra.mxu0 %v664
  %1243 = vmatprep.subr.mxu0 0.0
  %1244 = vmatpush2.msra.mxu0 %v663
  %1245 = vmatprep.subr.mxu0 0.0
  %1246 = vmatpush2.msra.mxu0 %v662
  %1247 = vmatprep.subr.mxu0 0.0
  %1248 = vmatpush2.msra.mxu0 %v661
  %1249 = vmatprep.subr.mxu0 0.0
  %1250 = vmatpush2.msra.mxu0 %v660
  %1251 = vmatprep.subr.mxu0 0.0
  %1252 = vmatpush2.msra.mxu0 %v659
  %1253 = vmatprep.mubr.f32.mxu0 %v381
  %1254 = vmatmul.mubr.f32.gmra.mxu0 %v380
  %v1255 = vpop.f32.mrf.mxu0
  %v1256 = vadd.f32 %v1046, %v1255
  %v1257 = vpop.f32.mrf.mxu0
  %1258 = vmatprep.mubr.f32.mxu0 %v388
  %1259 = vmatmul.mubr.f32.gmra.mxu0 %v387
  %v1260 = vpop.f32.mrf.mxu0
  %v1261 = vadd.f32 %v1051, %v1260
  %v1262 = vpop.f32.mrf.mxu0
  %1263 = vmatprep.mubr.f32.mxu0 %v395
  %1264 = vmatmul.mubr.f32.gmra.mxu0 %v394
  %v1265 = vpop.f32.mrf.mxu0
  %v1266 = vadd.f32 %v1056, %v1265
  %v1267 = vpop.f32.mrf.mxu0
  %1268 = vmatprep.mubr.f32.mxu0 %v402
  %1269 = vmatmul.mubr.f32.gmra.mxu0 %v401
  %v1270 = vpop.f32.mrf.mxu0
  %v1271 = vadd.f32 %v1061, %v1270
  %v1272 = vpop.f32.mrf.mxu0
  %1273 = vmatprep.mubr.f32.mxu0 %v409
  %1274 = vmatmul.mubr.f32.gmra.mxu0 %v408
  %v1275 = vpop.f32.mrf.mxu0
  %v1276 = vadd.f32 %v1066, %v1275
  %v1277 = vpop.f32.mrf.mxu0
  %1278 = vmatprep.mubr.f32.mxu0 %v416
  %1279 = vmatmul.mubr.f32.gmra.mxu0 %v415
  %v1280 = vpop.f32.mrf.mxu0
  %v1281 = vadd.f32 %v1071, %v1280
  %v1282 = vpop.f32.mrf.mxu0
  %1283 = vmatprep.mubr.f32.mxu0 %v423
  %1284 = vmatmul.mubr.f32.gmra.mxu0 %v422
  %v1285 = vpop.f32.mrf.mxu0
  %v1286 = vadd.f32 %v1076, %v1285
  %v1287 = vpop.f32.mrf.mxu0
  %1288 = vmatprep.mubr.f32.mxu0 %v430
  %1289 = vmatmul.mubr.f32.gmra.mxu0 %v429
  %v1290 = vpop.f32.mrf.mxu0
  %v1291 = vadd.f32 %v1081, %v1290
  %v1292 = vpop.f32.mrf.mxu0
  %1293 = vmatprep.mubr.f32.mxu0 %v437
  %1294 = vmatmul.mubr.f32.gmra.mxu0 %v436
  %v1295 = vpop.f32.mrf.mxu0
  %v1296 = vadd.f32 %v1086, %v1295
  %v1297 = vpop.f32.mrf.mxu0
  %1298 = vmatprep.mubr.f32.mxu0 %v444
  %1299 = vmatmul.mubr.f32.gmra.mxu0 %v443
  %v1300 = vpop.f32.mrf.mxu0
  %v1301 = vadd.f32 %v1091, %v1300
  %v1302 = vpop.f32.mrf.mxu0
  %1303 = vmatprep.mubr.f32.mxu0 %v451
  %1304 = vmatmul.mubr.f32.gmra.mxu0 %v450
  %v1305 = vpop.f32.mrf.mxu0
  %v1306 = vadd.f32 %v1096, %v1305
  %v1307 = vpop.f32.mrf.mxu0
  %1308 = vmatprep.mubr.f32.mxu0 %v458
  %1309 = vmatmul.mubr.f32.gmra.mxu0 %v457
  %v1310 = vpop.f32.mrf.mxu0
  %v1311 = vadd.f32 %v1101, %v1310
  %v1312 = vpop.f32.mrf.mxu0
  %1313 = vmatprep.mubr.f32.mxu0 %v465
  %1314 = vmatmul.mubr.f32.gmra.mxu0 %v464
  %v1315 = vpop.f32.mrf.mxu0
  %v1316 = vadd.f32 %v1106, %v1315
  %v1317 = vpop.f32.mrf.mxu0
  %1318 = vmatprep.mubr.f32.mxu0 %v472
  %1319 = vmatmul.mubr.f32.gmra.mxu0 %v471
  %v1320 = vpop.f32.mrf.mxu0
  %v1321 = vadd.f32 %v1111, %v1320
  %v1322 = vpop.f32.mrf.mxu0
  %1323 = vmatprep.mubr.f32.mxu0 %v479
  %1324 = vmatmul.mubr.f32.gmra.mxu0 %v478
  %v1325 = vpop.f32.mrf.mxu0
  %v1326 = vadd.f32 %v1116, %v1325
  %v1327 = vpop.f32.mrf.mxu0
  %1328 = vmatprep.mubr.f32.mxu0 %v486
  %1329 = vmatmul.mubr.f32.gmra.mxu0 %v485
  %v1330 = vpop.f32.mrf.mxu0
  %v1331 = vadd.f32 %v1121, %v1330
  %v1332 = vpop.f32.mrf.mxu0
  %1333 = vmatprep.mubr.f32.mxu0 %v493
  %1334 = vmatmul.mubr.f32.gmra.mxu0 %v492
  %v1335 = vpop.f32.mrf.mxu0
  %v1336 = vadd.f32 %v1126, %v1335
  %v1337 = vpop.f32.mrf.mxu0
  %1338 = vmatprep.mubr.f32.mxu0 %v500
  %1339 = vmatmul.mubr.f32.gmra.mxu0 %v499
  %v1340 = vpop.f32.mrf.mxu0
  %v1341 = vadd.f32 %v1131, %v1340
  %v1342 = vpop.f32.mrf.mxu0
  %1343 = vmatprep.mubr.f32.mxu0 %v507
  %1344 = vmatmul.mubr.f32.gmra.mxu0 %v506
  %v1345 = vpop.f32.mrf.mxu0
  %v1346 = vadd.f32 %v1136, %v1345
  %v1347 = vpop.f32.mrf.mxu0
  %1348 = vmatprep.mubr.f32.mxu0 %v514
  %1349 = vmatmul.mubr.f32.gmra.mxu0 %v513
  %v1350 = vpop.f32.mrf.mxu0
  %v1351 = vadd.f32 %v1141, %v1350
  %v1352 = vpop.f32.mrf.mxu0
  %1353 = vmatprep.mubr.f32.mxu0 %v521
  %1354 = vmatmul.mubr.f32.gmra.mxu0 %v520
  %v1355 = vpop.f32.mrf.mxu0
  %v1356 = vadd.f32 %v1146, %v1355
  %v1357 = vpop.f32.mrf.mxu0
  %1358 = vmatprep.mubr.f32.mxu0 %v528
  %1359 = vmatmul.mubr.f32.gmra.mxu0 %v527
  %v1360 = vpop.f32.mrf.mxu0
  %v1361 = vadd.f32 %v1151, %v1360
  %v1362 = vpop.f32.mrf.mxu0
  %1363 = vmatprep.mubr.f32.mxu0 %v535
  %1364 = vmatmul.mubr.f32.gmra.mxu0 %v534
  %v1365 = vpop.f32.mrf.mxu0
  %v1366 = vadd.f32 %v1156, %v1365
  %v1367 = vpop.f32.mrf.mxu0
  %1368 = vmatprep.mubr.f32.mxu0 %v542
  %1369 = vmatmul.mubr.f32.gmra.mxu0 %v541
  %v1370 = vpop.f32.mrf.mxu0
  %v1371 = vadd.f32 %v1161, %v1370
  %v1372 = vpop.f32.mrf.mxu0
  %1373 = vmatprep.mubr.f32.mxu0 %v549
  %1374 = vmatmul.mubr.f32.gmra.mxu0 %v548
  %v1375 = vpop.f32.mrf.mxu0
  %v1376 = vadd.f32 %v1166, %v1375
  %v1377 = vpop.f32.mrf.mxu0
  %1378 = vmatprep.mubr.f32.mxu0 %v556
  %1379 = vmatmul.mubr.f32.gmra.mxu0 %v555
  %v1380 = vpop.f32.mrf.mxu0
  %v1381 = vadd.f32 %v1171, %v1380
  %v1382 = vpop.f32.mrf.mxu0
  %1383 = vmatprep.mubr.f32.mxu0 %v563
  %1384 = vmatmul.mubr.f32.gmra.mxu0 %v562
  %v1385 = vpop.f32.mrf.mxu0
  %v1386 = vadd.f32 %v1176, %v1385
  %v1387 = vpop.f32.mrf.mxu0
  %1388 = vmatprep.mubr.f32.mxu0 %v570
  %1389 = vmatmul.mubr.f32.gmra.mxu0 %v569
  %v1390 = vpop.f32.mrf.mxu0
  %v1391 = vadd.f32 %v1181, %v1390
  %v1392 = vpop.f32.mrf.mxu0
  %1393 = vmatprep.mubr.f32.mxu0 %v577
  %1394 = vmatmul.mubr.f32.gmra.mxu0 %v576
  %v1395 = vpop.f32.mrf.mxu0
  %v1396 = vadd.f32 %v1186, %v1395
  %v1397 = vpop.f32.mrf.mxu0
  %1398 = vdwg.mxu0
  %1399 = vmatprep.subr.mxu0 0.0
  %1400 = vmatpush1.msra.mxu0 0.0
  %1401 = vmatprep.subr.mxu0 0.0
  %1402 = vmatpush1.msra.mxu0 0.0
  %1403 = vmatprep.subr.mxu0 0.0
  %1404 = vmatpush1.msra.mxu0 0.0
  %1405 = vmatprep.subr.mxu0 0.0
  %1406 = vmatpush1.msra.mxu0 0.0
  %1407 = vmatprep.subr.mxu0 0.0
  %1408 = vmatpush1.msra.mxu0 0.0
  %1409 = vmatprep.subr.mxu0 0.0
  %1410 = vmatpush1.msra.mxu0 0.0
  %1411 = vmatprep.subr.mxu0 0.0
  %1412 = vmatpush1.msra.mxu0 0.0
  %1413 = vmatprep.subr.mxu0 0.0
  %1414 = vmatpush1.msra.mxu0 0.0
  %1415 = vmatprep.subr.mxu0 0.0
  %1416 = vmatpush1.msra.mxu0 0.0
  %1417 = vmatprep.subr.mxu0 0.0
  %1418 = vmatpush1.msra.mxu0 0.0
  %1419 = vmatprep.subr.mxu0 0.0
  %1420 = vmatpush1.msra.mxu0 %v680
  %1421 = vmatprep.subr.mxu0 0.0
  %1422 = vmatpush1.msra.mxu0 %v679
  %1423 = vmatprep.subr.mxu0 0.0
  %1424 = vmatpush1.msra.mxu0 %v678
  %1425 = vmatprep.subr.mxu0 0.0
  %1426 = vmatpush1.msra.mxu0 %v677
  %1427 = vmatprep.subr.mxu0 0.0
  %1428 = vmatpush1.msra.mxu0 %v676
  %1429 = vmatprep.subr.mxu0 0.0
  %1430 = vmatpush1.msra.mxu0 %v675
  %1431 = vmatprep.subr.mxu0 0.0
  %1432 = vmatpush2.msra.mxu0 0.0
  %1433 = vmatprep.subr.mxu0 0.0
  %1434 = vmatpush2.msra.mxu0 0.0
  %1435 = vmatprep.subr.mxu0 0.0
  %1436 = vmatpush2.msra.mxu0 0.0
  %1437 = vmatprep.subr.mxu0 0.0
  %1438 = vmatpush2.msra.mxu0 0.0
  %1439 = vmatprep.subr.mxu0 0.0
  %1440 = vmatpush2.msra.mxu0 0.0
  %1441 = vmatprep.subr.mxu0 0.0
  %1442 = vmatpush2.msra.mxu0 0.0
  %1443 = vmatprep.subr.mxu0 0.0
  %1444 = vmatpush2.msra.mxu0 0.0
  %1445 = vmatprep.subr.mxu0 0.0
  %1446 = vmatpush2.msra.mxu0 0.0
  %1447 = vmatprep.subr.mxu0 0.0
  %1448 = vmatpush2.msra.mxu0 0.0
  %1449 = vmatprep.subr.mxu0 0.0
  %1450 = vmatpush2.msra.mxu0 0.0
  %1451 = vmatprep.subr.mxu0 0.0
  %1452 = vmatpush2.msra.mxu0 0.0
  %1453 = vmatprep.subr.mxu0 0.0
  %1454 = vmatpush2.msra.mxu0 0.0
  %1455 = vmatprep.subr.mxu0 0.0
  %1456 = vmatpush2.msra.mxu0 0.0
  %1457 = vmatprep.subr.mxu0 0.0
  %1458 = vmatpush2.msra.mxu0 0.0
  %1459 = vmatprep.subr.mxu0 0.0
  %1460 = vmatpush2.msra.mxu0 0.0
  %1461 = vmatprep.subr.mxu0 0.0
  %1462 = vmatpush2.msra.mxu0 0.0
  %1463 = vmatprep.mubr.f32.mxu0 0.0
  %1464 = vmatmul.mubr.f32.gmra.mxu0 %v683
  %v1465 = vpop.f32.mrf.mxu0
  %v1466 = vadd.f32 %v1256, %v1465
  %v1467 = vpop.f32.mrf.mxu0
  %1468 = vmatprep.mubr.f32.mxu0 0.0
  %1469 = vmatmul.mubr.f32.gmra.mxu0 %v686
  %v1470 = vpop.f32.mrf.mxu0
  %v1471 = vadd.f32 %v1261, %v1470
  %v1472 = vpop.f32.mrf.mxu0
  %1473 = vmatprep.mubr.f32.mxu0 0.0
  %1474 = vmatmul.mubr.f32.gmra.mxu0 %v689
  %v1475 = vpop.f32.mrf.mxu0
  %v1476 = vadd.f32 %v1266, %v1475
  %v1477 = vpop.f32.mrf.mxu0
  %1478 = vmatprep.mubr.f32.mxu0 0.0
  %1479 = vmatmul.mubr.f32.gmra.mxu0 %v692
  %v1480 = vpop.f32.mrf.mxu0
  %v1481 = vadd.f32 %v1271, %v1480
  %v1482 = vpop.f32.mrf.mxu0
  %1483 = vmatprep.mubr.f32.mxu0 0.0
  %1484 = vmatmul.mubr.f32.gmra.mxu0 %v695
  %v1485 = vpop.f32.mrf.mxu0
  %v1486 = vadd.f32 %v1276, %v1485
  %v1487 = vpop.f32.mrf.mxu0
  %1488 = vmatprep.mubr.f32.mxu0 0.0
  %1489 = vmatmul.mubr.f32.gmra.mxu0 %v698
  %v1490 = vpop.f32.mrf.mxu0
  %v1491 = vadd.f32 %v1281, %v1490
  %v1492 = vpop.f32.mrf.mxu0
  %1493 = vmatprep.mubr.f32.mxu0 0.0
  %1494 = vmatmul.mubr.f32.gmra.mxu0 %v701
  %v1495 = vpop.f32.mrf.mxu0
  %v1496 = vadd.f32 %v1286, %v1495
  %v1497 = vpop.f32.mrf.mxu0
  %1498 = vmatprep.mubr.f32.mxu0 0.0
  %1499 = vmatmul.mubr.f32.gmra.mxu0 %v704
  %v1500 = vpop.f32.mrf.mxu0
  %v1501 = vadd.f32 %v1291, %v1500
  %v1502 = vpop.f32.mrf.mxu0
  %1503 = vmatprep.mubr.f32.mxu0 0.0
  %1504 = vmatmul.mubr.f32.gmra.mxu0 %v707
  %v1505 = vpop.f32.mrf.mxu0
  %v1506 = vadd.f32 %v1296, %v1505
  %v1507 = vpop.f32.mrf.mxu0
  %1508 = vmatprep.mubr.f32.mxu0 0.0
  %1509 = vmatmul.mubr.f32.gmra.mxu0 %v710
  %v1510 = vpop.f32.mrf.mxu0
  %v1511 = vadd.f32 %v1301, %v1510
  %v1512 = vpop.f32.mrf.mxu0
  %1513 = vmatprep.mubr.f32.mxu0 0.0
  %1514 = vmatmul.mubr.f32.gmra.mxu0 %v713
  %v1515 = vpop.f32.mrf.mxu0
  %v1516 = vadd.f32 %v1306, %v1515
  %v1517 = vpop.f32.mrf.mxu0
  %1518 = vmatprep.mubr.f32.mxu0 0.0
  %1519 = vmatmul.mubr.f32.gmra.mxu0 %v716
  %v1520 = vpop.f32.mrf.mxu0
  %v1521 = vadd.f32 %v1311, %v1520
  %v1522 = vpop.f32.mrf.mxu0
  %1523 = vmatprep.mubr.f32.mxu0 0.0
  %1524 = vmatmul.mubr.f32.gmra.mxu0 %v719
  %v1525 = vpop.f32.mrf.mxu0
  %v1526 = vadd.f32 %v1316, %v1525
  %v1527 = vpop.f32.mrf.mxu0
  %1528 = vmatprep.mubr.f32.mxu0 0.0
  %1529 = vmatmul.mubr.f32.gmra.mxu0 %v722
  %v1530 = vpop.f32.mrf.mxu0
  %v1531 = vadd.f32 %v1321, %v1530
  %v1532 = vpop.f32.mrf.mxu0
  %1533 = vmatprep.mubr.f32.mxu0 0.0
  %1534 = vmatmul.mubr.f32.gmra.mxu0 %v725
  %v1535 = vpop.f32.mrf.mxu0
  %v1536 = vadd.f32 %v1326, %v1535
  %v1537 = vpop.f32.mrf.mxu0
  %1538 = vmatprep.mubr.f32.mxu0 0.0
  %1539 = vmatmul.mubr.f32.gmra.mxu0 %v728
  %v1540 = vpop.f32.mrf.mxu0
  %v1541 = vadd.f32 %v1331, %v1540
  %v1542 = vpop.f32.mrf.mxu0
  %1543 = vmatprep.mubr.f32.mxu0 0.0
  %1544 = vmatmul.mubr.f32.gmra.mxu0 %v731
  %v1545 = vpop.f32.mrf.mxu0
  %v1546 = vadd.f32 %v1336, %v1545
  %v1547 = vpop.f32.mrf.mxu0
  %1548 = vmatprep.mubr.f32.mxu0 0.0
  %1549 = vmatmul.mubr.f32.gmra.mxu0 %v734
  %v1550 = vpop.f32.mrf.mxu0
  %v1551 = vadd.f32 %v1341, %v1550
  %v1552 = vpop.f32.mrf.mxu0
  %1553 = vmatprep.mubr.f32.mxu0 0.0
  %1554 = vmatmul.mubr.f32.gmra.mxu0 %v737
  %v1555 = vpop.f32.mrf.mxu0
  %v1556 = vadd.f32 %v1346, %v1555
  %v1557 = vpop.f32.mrf.mxu0
  %1558 = vmatprep.mubr.f32.mxu0 0.0
  %1559 = vmatmul.mubr.f32.gmra.mxu0 %v740
  %v1560 = vpop.f32.mrf.mxu0
  %v1561 = vadd.f32 %v1351, %v1560
  %v1562 = vpop.f32.mrf.mxu0
  %1563 = vmatprep.mubr.f32.mxu0 0.0
  %1564 = vmatmul.mubr.f32.gmra.mxu0 %v743
  %v1565 = vpop.f32.mrf.mxu0
  %v1566 = vadd.f32 %v1356, %v1565
  %v1567 = vpop.f32.mrf.mxu0
  %1568 = vmatprep.mubr.f32.mxu0 0.0
  %1569 = vmatmul.mubr.f32.gmra.mxu0 %v746
  %v1570 = vpop.f32.mrf.mxu0
  %v1571 = vadd.f32 %v1361, %v1570
  %v1572 = vpop.f32.mrf.mxu0
  %1573 = vmatprep.mubr.f32.mxu0 0.0
  %1574 = vmatmul.mubr.f32.gmra.mxu0 %v749
  %v1575 = vpop.f32.mrf.mxu0
  %v1576 = vadd.f32 %v1366, %v1575
  %v1577 = vpop.f32.mrf.mxu0
  %1578 = vmatprep.mubr.f32.mxu0 0.0
  %1579 = vmatmul.mubr.f32.gmra.mxu0 %v752
  %v1580 = vpop.f32.mrf.mxu0
  %v1581 = vadd.f32 %v1371, %v1580
  %v1582 = vpop.f32.mrf.mxu0
  %1583 = vmatprep.mubr.f32.mxu0 0.0
  %1584 = vmatmul.mubr.f32.gmra.mxu0 %v755
  %v1585 = vpop.f32.mrf.mxu0
  %v1586 = vadd.f32 %v1376, %v1585
  %v1587 = vpop.f32.mrf.mxu0
  %1588 = vmatprep.mubr.f32.mxu0 0.0
  %1589 = vmatmul.mubr.f32.gmra.mxu0 %v758
  %v1590 = vpop.f32.mrf.mxu0
  %v1591 = vadd.f32 %v1381, %v1590
  %v1592 = vpop.f32.mrf.mxu0
  %1593 = vmatprep.mubr.f32.mxu0 0.0
  %1594 = vmatmul.mubr.f32.gmra.mxu0 %v761
  %v1595 = vpop.f32.mrf.mxu0
  %v1596 = vadd.f32 %v1386, %v1595
  %v1597 = vpop.f32.mrf.mxu0
  %1598 = vmatprep.mubr.f32.mxu0 0.0
  %1599 = vmatmul.mubr.f32.gmra.mxu0 %v764
  %v1600 = vpop.f32.mrf.mxu0
  %v1601 = vadd.f32 %v1391, %v1600
  %v1602 = vpop.f32.mrf.mxu0
  %1603 = vmatprep.mubr.f32.mxu0 0.0
  %1604 = vmatmul.mubr.f32.gmra.mxu0 %v767
  %v1605 = vpop.f32.mrf.mxu0
  %v1606 = vadd.f32 %v1396, %v1605
  %v1607 = vpop.f32.mrf.mxu0
  %1608 = vdwg.mxu0
  %vm1609 = vcmask 400384
  %1610 = vst.msk [vmem:[%s3] sm:$0xff] %vm1609, %v1466
  %1611 = vst.msk [vmem:[%s3 + $0x8] sm:$0xff] %vm1609, %v1471
  %1612 = vst.msk [vmem:[%s3 + $0x10] sm:$0xff] %vm1609, %v1476
  %1613 = vst.msk [vmem:[%s3 + $0x18] sm:$0xff] %vm1609, %v1481
  %1614 = vst.msk [vmem:[%s3 + $0x20] sm:$0xff] %vm1609, %v1486
  %1615 = vst.msk [vmem:[%s3 + $0x28] sm:$0xff] %vm1609, %v1491
  %1616 = vst.msk [vmem:[%s3 + $0x30] sm:$0xff] %vm1609, %v1496
  %1617 = vst.msk [vmem:[%s3 + $0x38] sm:$0xff] %vm1609, %v1501
  %1618 = vst.msk [vmem:[%s3 + $0x40] sm:$0xff] %vm1609, %v1506
  %1619 = vst.msk [vmem:[%s3 + $0x48] sm:$0xff] %vm1609, %v1511
  %1620 = vst.msk [vmem:[%s3 + $0x50] sm:$0xff] %vm1609, %v1516
  %1621 = vst.msk [vmem:[%s3 + $0x58] sm:$0xff] %vm1609, %v1521
  %1622 = vst.msk [vmem:[%s3 + $0x60] sm:$0xff] %vm1609, %v1526
  %1623 = vst.msk [vmem:[%s3 + $0x68] sm:$0xff] %vm1609, %v1531
  %1624 = vst.msk [vmem:[%s3 + $0x70] sm:$0xff] %vm1609, %v1536
  %1625 = vst.msk [vmem:[%s3 + $0x78] sm:$0xff] %vm1609, %v1541
  %1626 = vst.msk [vmem:[%s3 + $0x80] sm:$0xff] %vm1609, %v1546
  %1627 = vst.msk [vmem:[%s3 + $0x88] sm:$0xff] %vm1609, %v1551
  %1628 = vst.msk [vmem:[%s3 + $0x90] sm:$0xff] %vm1609, %v1556
  %1629 = vst.msk [vmem:[%s3 + $0x98] sm:$0xff] %vm1609, %v1561
  %1630 = vst.msk [vmem:[%s3 + $0xa0] sm:$0xff] %vm1609, %v1566
  %1631 = vst.msk [vmem:[%s3 + $0xa8] sm:$0xff] %vm1609, %v1571
  %1632 = vst.msk [vmem:[%s3 + $0xb0] sm:$0xff] %vm1609, %v1576
  %1633 = vst.msk [vmem:[%s3 + $0xb8] sm:$0xff] %vm1609, %v1581
  %1634 = vst.msk [vmem:[%s3 + $0xc0] sm:$0xff] %vm1609, %v1586
  %1635 = vst.msk [vmem:[%s3 + $0xc8] sm:$0xff] %vm1609, %v1591
  %1636 = vst.msk [vmem:[%s3 + $0xd0] sm:$0xff] %vm1609, %v1596
  %1637 = vst.msk [vmem:[%s3 + $0xd8] sm:$0xff] %vm1609, %v1601
  %1638 = vst.msk [vmem:[%s3 + $0xe0] sm:$0xff] %vm1609, %v1606
  // Predicated region
  $region14: #{tpu_custom_call.1} parent=0 // pred_check
    _
  $region15: #{tpu_custom_call.1} parent=0 // pred_check_branch
    %1640 = sbr.rel (0) target = $region17
  $region16: #{tpu_custom_call.1} parent=0 // pred_region
    _
  $region17: #{tpu_custom_call.1} parent=0 // pred_fallthru
    _
  // Predicated region
  $region18: #{tpu_custom_call.1} parent=0 // pred_check
    _
  $region19: #{tpu_custom_call.1} parent=0 // pred_check_branch
    %1642 = sbr.rel (0) target = $region21
  $region20: #{tpu_custom_call.1} parent=0 // pred_region
    _
  $region21: #{tpu_custom_call.1} parent=0 // pred_fallthru
    _

</llo_original>
